<compile_context>
chip_gen: v5e
topology: v5e:2x2
jax: 0.10.0
libtpu: 0.0.40
codegen_flags: <defaults>
</compile_context>

<pallas_src>
import functools

import jax
import jax.numpy as jnp
from jax import lax
from jax.experimental import pallas as pl
from jax.experimental.pallas import tpu as pltpu


_NEG = -1e30  # finite "-inf" for padded logit lanes: exp() underflows to exactly 0, no NaN risk


def _round_up(x, m):
    return -(-x // m) * m


def rnn_seq_kernel(x_ref, h0_ref, w_in_ref, w_hid_ref, b_ref,
                   out_ref, hT_ref, h_scratch, *, h_pad):
    """One (batch_tile, time_chunk) grid point.

    x_ref    : (Tc, bt, I)     inputs for this time chunk / batch tile
    h0_ref   : (bt, Hp)        initial hidden (read only in the first chunk)
    w_in_ref : (I,  Hp+Op)     fused [i2h | i2o] weights, input rows   (VMEM-resident)
    w_hid_ref: (Hp, Hp+Op)     fused weights, hidden rows              (VMEM-resident)
    b_ref    : (1,  Hp+Op)     fused bias; padded logit lanes hold -1e30
    out_ref  : (Tc, bt, Op)    per-step log-softmax (lane-dense)
    hT_ref   : (bt, Hp)        final hidden state
    h_scratch: (bt, Hp) f32    hidden-state carry across time chunks
    """
    tc = pl.program_id(1)

    @pl.when(tc == 0)
    def _():
        h_scratch[...] = h0_ref[...].astype(jnp.float32)

    # Loop-invariant hoists: weight loads/casts and the bias broadcast happen once per
    # grid step, not once per timestep (JAX does not CSE broadcast_in_dim).
    bt = h_scratch.shape[0]
    hop = b_ref.shape[1]
    w_in = w_in_ref[...].astype(jnp.float32)
    w_hid = w_hid_ref[...].astype(jnp.float32)
    bias = jnp.broadcast_to(b_ref[...], (bt, hop))

    t_chunk = x_ref.shape[0]

    def step(t, h):
        x_t = x_ref[t].astype(jnp.float32)                       # (bt, I)
        # Single fused result:  [ i2h(combined) | i2o(combined) ]  ->  (bt, Hp+Op)
        fused = (jnp.dot(x_t, w_in, preferred_element_type=jnp.float32)
                 + jnp.dot(h, w_hid, preferred_element_type=jnp.float32)
                 + bias)
        new_h = fused[:, :h_pad]          # vreg-aligned split (h_pad is a 128 multiple)
        logits = fused[:, h_pad:]         # padded lanes ~ -1e30
        # Numerically-stable log-softmax over the class axis, f32 throughout
        # (v5e VPU/EUP have no bf16).
        m = jnp.max(logits, axis=1, keepdims=True)
        shifted = logits - m
        lse = jnp.log(jnp.sum(jnp.exp(shifted), axis=1, keepdims=True))
        out_ref[t] = (shifted - lse).astype(out_ref.dtype)       # full-width lane-dense store
        return new_h

    h = lax.fori_loop(0, t_chunk, step, h_scratch[...], unroll=True)

    # Carry hidden in VMEM across chunks; the hT output block is revisited across the
    # time axis ("arbitrary"), so HBM writeback happens only once at the end.
    h_scratch[...] = h
    hT_ref[...] = h.astype(hT_ref.dtype)


def rnn_sequence_forward(xs, h0, w_i2h, b_i2h, w_i2o, b_i2o,
                         *, block_b=None, time_chunk=None):
    """Run the RNN cell over a whole sequence in one pallas_call.

    xs : (T, B, I)   inputs per timestep
    h0 : (B, H)      initial hidden state
    Returns (outputs (T, B, O), final_hidden (B, H)).
    """
    T, B, I = xs.shape
    H = h0.shape[1]
    O = b_i2o.shape[0]

    H_pad = _round_up(H, 128)
    O_pad = _round_up(O, 128)
    HO_pad = H_pad + O_pad

    if block_b is None:
        # Prefer MXU-friendly 128/256-row batch tiles when the batch allows (also gives
        # v7x's 2 TensorCores a >=2-extent parallel axis); fall back to the full batch.
        block_b = next((c for c in (256, 128) if B % c == 0), B)
    assert B % block_b == 0, "batch must be divisible by block_b"

    if time_chunk is None:
        time_chunk = next(c for c in range(min(T, 32), 0, -1) if T % c == 0)
    assert T % time_chunk == 0, "seq length must be divisible by time_chunk"

    # One-time weight re-layout (outside the time loop, single XLA op under jit):
    # fused (I+H, HO_pad) = [ pad(w_i2h.T) | pad(w_i2o.T) ], split into input rows /
    # hidden rows.  Padded hidden lanes stay exactly 0 (zero weight cols + zero bias);
    # padded logit lanes get a -1e30 bias so they vanish from the softmax normalizer.
    w_h_cols = jnp.pad(w_i2h.T, ((0, 0), (0, H_pad - H)))          # (I+H, H_pad)
    w_o_cols = jnp.pad(w_i2o.T, ((0, 0), (0, O_pad - O)))          # (I+H, O_pad)
    w_fused = jnp.concatenate([w_h_cols, w_o_cols], axis=1)        # (I+H, HO_pad)
    w_in = w_fused[:I]                                             # (I, HO_pad)
    w_hid = jnp.pad(w_fused[I:], ((0, H_pad - H), (0, 0)))         # (H_pad, HO_pad)
    b_fused = jnp.concatenate([
        jnp.pad(b_i2h, (0, H_pad - H)),
        jnp.pad(b_i2o, (0, O_pad - O), constant_values=_NEG),
    ]).reshape(1, HO_pad)
    h0_p = jnp.pad(h0, ((0, 0), (0, H_pad - H)))                   # (B, H_pad)

    grid = (B // block_b, T // time_chunk)

    out_p, hT_p = pl.pallas_call(
        functools.partial(rnn_seq_kernel, h_pad=H_pad),
        out_shape=(
            jax.ShapeDtypeStruct((T, B, O_pad), jnp.float32),
            jax.ShapeDtypeStruct((B, H_pad), jnp.float32),
        ),
        grid=grid,
        in_specs=[
            pl.BlockSpec((time_chunk, block_b, I), lambda b, t: (t, b, 0)),  # chunked input
            pl.BlockSpec((block_b, H_pad), lambda b, t: (b, 0)),             # h0 per b-tile
            pl.BlockSpec((I, HO_pad), lambda b, t: (0, 0)),                  # weights: resident
            pl.BlockSpec((H_pad, HO_pad), lambda b, t: (0, 0)),              # weights: resident
            pl.BlockSpec((1, HO_pad), lambda b, t: (0, 0)),                  # bias: resident
        ],
        out_specs=(
            pl.BlockSpec((time_chunk, block_b, O_pad), lambda b, t: (t, b, 0)),  # log-probs
            pl.BlockSpec((block_b, H_pad), lambda b, t: (b, 0)),                 # final hidden
        ),
        scratch_shapes=[pltpu.VMEM((block_b, H_pad), jnp.float32)],  # hidden-state carry
        compiler_params=pltpu.CompilerParams(
            dimension_semantics=("parallel", "arbitrary"),
            vmem_limit_bytes=32 * 1024 * 1024,
        ),
    )(xs, h0_p, w_in, w_hid, b_fused)

    # Strip padding outside the kernel (cheap slices; outputs stay lane-dense in HBM).
    return out_p[..., :O], hT_p[:, :H]


def rnn_forward(inp, hidden, w_i2h, b_i2h, w_i2o, b_i2o):
    """Single-step API matching RNN.forward(input, hidden) -> (output, hidden)."""
    out_seq, new_hidden = rnn_sequence_forward(inp[None, ...], hidden,
                                               w_i2h, b_i2h, w_i2o, b_i2o)
    return out_seq[0], new_hidden


def init_params(key, input_size, hidden_size, output_size):
    """Deterministic param init mimicking nn.Linear (uniform +-1/sqrt(fan_in))."""
    k1, k2, k3, k4 = jax.random.split(key, 4)
    fan_in = input_size + hidden_size
    bound = 1.0 / jnp.sqrt(fan_in)
    w_i2h = jax.random.uniform(k1, (hidden_size, fan_in), jnp.float32, -bound, bound)
    b_i2h = jax.random.uniform(k2, (hidden_size,), jnp.float32, -bound, bound)
    w_i2o = jax.random.uniform(k3, (output_size, fan_in), jnp.float32, -bound, bound)
    b_i2o = jax.random.uniform(k4, (output_size,), jnp.float32, -bound, bound)
    return w_i2h, b_i2h, w_i2o, b_i2o


if __name__ == "__main__":
    # Small shapes consistent with the module (one-hot-ish letters -> class log-probs).
    batch = 8
    seq_len = 16
    input_size = 32
    hidden_size = 64
    output_size = 16

    key = jax.random.PRNGKey(0)
    k_x, k_par = jax.random.split(key, 2)

    xs = jax.random.normal(k_x, (seq_len, batch, input_size), jnp.float32)
    h0 = jnp.zeros((batch, hidden_size), jnp.float32)          # RNN.init_hidden (batched)
    w_i2h, b_i2h, w_i2o, b_i2o = init_params(k_par, input_size, hidden_size, output_size)

    # Full-sequence kernel (the fast path).
    out_seq, h_final = jax.jit(rnn_sequence_forward)(xs, h0, w_i2h, b_i2h, w_i2o, b_i2o)
    jax.block_until_ready((out_seq, h_final))

    # Reference: plain-JAX scan of the PyTorch cell.
    def ref_step(h, x_t):
        comb = jnp.concatenate([x_t, h], axis=1)
        new_h = comb @ w_i2h.T + b_i2h
        logits = comb @ w_i2o.T + b_i2o
        return new_h, jax.nn.log_softmax(logits, axis=1)

    ref_h, ref_out = lax.scan(ref_step, h0, xs)
    assert jnp.allclose(out_seq, ref_out, atol=1e-4), "sequence log-softmax mismatch"
    assert jnp.allclose(h_final, ref_h, atol=1e-4), "final hidden mismatch"

    # Single-step API (module-equivalent forward) also works.
    out1, h1 = rnn_forward(xs[0], h0, w_i2h, b_i2h, w_i2o, b_i2o)
    jax.block_until_ready((out1, h1))
    comb0 = jnp.concatenate([xs[0], h0], axis=1)
    assert jnp.allclose(h1, comb0 @ w_i2h.T + b_i2h, atol=1e-4), "step hidden mismatch"
    assert jnp.allclose(out1, jax.nn.log_softmax(comb0 @ w_i2o.T + b_i2o, axis=1),
                        atol=1e-4), "step output mismatch"

    print("KERNEL_OK")
</pallas_src>

<mosaic_0001>
module attributes {stable_mosaic.version = 11 : i64} {
  func.func @rnn_seq_kernel(%arg0: i32, %arg1: i32, %arg2: memref<16x8x32xf32, #tpu.memory_space<vmem>>, %arg3: memref<8x128xf32, #tpu.memory_space<vmem>>, %arg4: memref<32x256xf32, #tpu.memory_space<vmem>>, %arg5: memref<128x256xf32, #tpu.memory_space<vmem>>, %arg6: memref<1x256xf32, #tpu.memory_space<vmem>>, %arg7: memref<16x8x128xf32, #tpu.memory_space<vmem>>, %arg8: memref<8x128xf32, #tpu.memory_space<vmem>>, %arg9: memref<8x128xf32, #tpu.memory_space<vmem>>) attributes {dimension_semantics = [#tpu.dimension_semantics<parallel>, #tpu.dimension_semantics<arbitrary>], iteration_bounds = array<i64: 1, 1>, scalar_prefetch = 0 : i64, scratch_operands = 1 : i64, tpu.core_type = #tpu.core_type<tc>, window_params = [{transform_indices = @transform_0, window_bounds = array<i64: 16, 8, 32>}, {transform_indices = @transform_1, window_bounds = array<i64: 8, 128>}, {pipeline_mode = #tpu.pipeline_mode<synchronous>, transform_indices = @transform_2, window_bounds = array<i64: 32, 256>}, {pipeline_mode = #tpu.pipeline_mode<synchronous>, transform_indices = @transform_3, window_bounds = array<i64: 128, 256>}, {pipeline_mode = #tpu.pipeline_mode<synchronous>, transform_indices = @transform_4, window_bounds = array<i64: 1, 256>}, {transform_indices = @transform_5, window_bounds = array<i64: 16, 8, 128>}, {transform_indices = @transform_6, window_bounds = array<i64: 8, 128>}]} {
    %c0_i32 = arith.constant 0 : i32
    %0 = arith.cmpi eq, %arg1, %c0_i32 : i32
    %1 = arith.extui %0 : i1 to i32
    %c0_i32_0 = arith.constant 0 : i32
    %2 = arith.cmpi ne, %1, %c0_i32_0 : i32
    scf.if %2 {
      %c0_140 = arith.constant 0 : index
      %c0_141 = arith.constant 0 : index
      %379 = vector.load %arg3[%c0_140, %c0_141] : memref<8x128xf32, #tpu.memory_space<vmem>>, vector<8x128xf32>
      %c0_142 = arith.constant 0 : index
      %c0_143 = arith.constant 0 : index
      %380 = vector.load %arg9[%c0_142, %c0_143] : memref<8x128xf32, #tpu.memory_space<vmem>>, vector<8x128xf32>
      tpu.vector_store %arg9[%c0_142, %c0_143], %379 {strides = array<i32>} : memref<8x128xf32, #tpu.memory_space<vmem>>, vector<8x128xf32>,
    } else {
    }
    %c0 = arith.constant 0 : index
    %c0_1 = arith.constant 0 : index
    %3 = vector.load %arg4[%c0, %c0_1] : memref<32x256xf32, #tpu.memory_space<vmem>>, vector<32x256xf32>
    %c0_2 = arith.constant 0 : index
    %c0_3 = arith.constant 0 : index
    %4 = vector.load %arg5[%c0_2, %c0_3] : memref<128x256xf32, #tpu.memory_space<vmem>>, vector<128x256xf32>
    %c0_4 = arith.constant 0 : index
    %c0_5 = arith.constant 0 : index
    %5 = vector.load %arg6[%c0_4, %c0_5] : memref<1x256xf32, #tpu.memory_space<vmem>>, vector<1x256xf32>
    %6 = vector.shape_cast %5 : vector<1x256xf32> to vector<1x256xf32>
    %7 = vector.broadcast %6 : vector<1x256xf32> to vector<8x256xf32>
    %c0_6 = arith.constant 0 : index
    %c0_7 = arith.constant 0 : index
    %8 = vector.load %arg9[%c0_6, %c0_7] : memref<8x128xf32, #tpu.memory_space<vmem>>, vector<8x128xf32>
    %c0_i32_8 = arith.constant 0 : i32
    %9 = arith.index_cast %c0_i32_8 : i32 to index
    %c0_9 = arith.constant 0 : index
    %c0_10 = arith.constant 0 : index
    %10 = vector.load %arg2[%9, %c0_9, %c0_10] : memref<16x8x32xf32, #tpu.memory_space<vmem>>, vector<1x8x32xf32>
    %11 = vector.shape_cast %10 : vector<1x8x32xf32> to vector<8x32xf32>
    %cst = arith.constant dense<0.000000e+00> : vector<8x256xf32>
    %12 = tpu.matmul %11, %3, %cst {dimension_numbers = #tpu.dot_dimension_numbers<[1], [0], [0], [1], [0, 0, 1, 1], [], []>} : vector<8x32xf32>, vector<32x256xf32>, vector<8x256xf32> -> vector<8x256xf32>
    %cst_11 = arith.constant dense<0.000000e+00> : vector<8x256xf32>
    %13 = tpu.matmul %8, %4, %cst_11 {dimension_numbers = #tpu.dot_dimension_numbers<[1], [0], [0], [1], [0, 0, 1, 1], [], []>} : vector<8x128xf32>, vector<128x256xf32>, vector<8x256xf32> -> vector<8x256xf32>
    %14 = arith.addf %12, %13 : vector<8x256xf32>
    %15 = arith.addf %14, %7 : vector<8x256xf32>
    %16 = vector.extract_strided_slice %15 {offsets = [0, 0], sizes = [8, 128], strides = [1, 1]} : vector<8x256xf32> to vector<8x128xf32>
    %17 = vector.extract_strided_slice %15 {offsets = [0, 128], sizes = [8, 128], strides = [1, 1]} : vector<8x256xf32> to vector<8x128xf32>
    %cst_12 = arith.constant dense<0xFF800000> : vector<8xf32>
    %18 = vector.multi_reduction <maximumf>, %17, %cst_12 [1] : vector<8x128xf32> to vector<8xf32>
    %19 = vector.shape_cast %18 : vector<8xf32> to vector<8x1xf32>
    %20 = vector.broadcast %19 : vector<8x1xf32> to vector<8x128xf32>
    %21 = arith.subf %17, %20 : vector<8x128xf32>
    %22 = math.exp %21 : vector<8x128xf32>
    %cst_13 = arith.constant dense<0.000000e+00> : vector<8xf32>
    %23 = vector.multi_reduction <add>, %22, %cst_13 [1] : vector<8x128xf32> to vector<8xf32>
    %24 = vector.shape_cast %23 : vector<8xf32> to vector<8x1xf32>
    %25 = math.log %24 : vector<8x1xf32>
    %26 = vector.broadcast %25 : vector<8x1xf32> to vector<8x128xf32>
    %27 = arith.subf %21, %26 : vector<8x128xf32>
    %28 = arith.index_cast %c0_i32_8 : i32 to index
    %c0_14 = arith.constant 0 : index
    %c0_15 = arith.constant 0 : index
    %29 = vector.load %arg7[%28, %c0_14, %c0_15] : memref<16x8x128xf32, #tpu.memory_space<vmem>>, vector<1x8x128xf32>
    %30 = vector.shape_cast %29 : vector<1x8x128xf32> to vector<8x128xf32>
    %31 = vector.shape_cast %27 : vector<8x128xf32> to vector<1x8x128xf32>
    tpu.vector_store %arg7[%28, %c0_14, %c0_15], %31 {strides = array<i32>} : memref<16x8x128xf32, #tpu.memory_space<vmem>>, vector<1x8x128xf32>,
    %c1_i32 = arith.constant 1 : i32
    %32 = arith.index_cast %c1_i32 : i32 to index
    %c0_16 = arith.constant 0 : index
    %c0_17 = arith.constant 0 : index
    %33 = vector.load %arg2[%32, %c0_16, %c0_17] : memref<16x8x32xf32, #tpu.memory_space<vmem>>, vector<1x8x32xf32>
    %34 = vector.shape_cast %33 : vector<1x8x32xf32> to vector<8x32xf32>
    %cst_18 = arith.constant dense<0.000000e+00> : vector<8x256xf32>
    %35 = tpu.matmul %34, %3, %cst_18 {dimension_numbers = #tpu.dot_dimension_numbers<[1], [0], [0], [1], [0, 0, 1, 1], [], []>} : vector<8x32xf32>, vector<32x256xf32>, vector<8x256xf32> -> vector<8x256xf32>
    %cst_19 = arith.constant dense<0.000000e+00> : vector<8x256xf32>
    %36 = tpu.matmul %16, %4, %cst_19 {dimension_numbers = #tpu.dot_dimension_numbers<[1], [0], [0], [1], [0, 0, 1, 1], [], []>} : vector<8x128xf32>, vector<128x256xf32>, vector<8x256xf32> -> vector<8x256xf32>
    %37 = arith.addf %35, %36 : vector<8x256xf32>
    %38 = arith.addf %37, %7 : vector<8x256xf32>
    %39 = vector.extract_strided_slice %38 {offsets = [0, 0], sizes = [8, 128], strides = [1, 1]} : vector<8x256xf32> to vector<8x128xf32>
    %40 = vector.extract_strided_slice %38 {offsets = [0, 128], sizes = [8, 128], strides = [1, 1]} : vector<8x256xf32> to vector<8x128xf32>
    %cst_20 = arith.constant dense<0xFF800000> : vector<8xf32>
    %41 = vector.multi_reduction <maximumf>, %40, %cst_20 [1] : vector<8x128xf32> to vector<8xf32>
    %42 = vector.shape_cast %41 : vector<8xf32> to vector<8x1xf32>
    %43 = vector.broadcast %42 : vector<8x1xf32> to vector<8x128xf32>
    %44 = arith.subf %40, %43 : vector<8x128xf32>
    %45 = math.exp %44 : vector<8x128xf32>
    %cst_21 = arith.constant dense<0.000000e+00> : vector<8xf32>
    %46 = vector.multi_reduction <add>, %45, %cst_21 [1] : vector<8x128xf32> to vector<8xf32>
    %47 = vector.shape_cast %46 : vector<8xf32> to vector<8x1xf32>
    %48 = math.log %47 : vector<8x1xf32>
    %49 = vector.broadcast %48 : vector<8x1xf32> to vector<8x128xf32>
    %50 = arith.subf %44, %49 : vector<8x128xf32>
    %51 = arith.index_cast %c1_i32 : i32 to index
    %c0_22 = arith.constant 0 : index
    %c0_23 = arith.constant 0 : index
    %52 = vector.load %arg7[%51, %c0_22, %c0_23] : memref<16x8x128xf32, #tpu.memory_space<vmem>>, vector<1x8x128xf32>
    %53 = vector.shape_cast %52 : vector<1x8x128xf32> to vector<8x128xf32>
    %54 = vector.shape_cast %50 : vector<8x128xf32> to vector<1x8x128xf32>
    tpu.vector_store %arg7[%51, %c0_22, %c0_23], %54 {strides = array<i32>} : memref<16x8x128xf32, #tpu.memory_space<vmem>>, vector<1x8x128xf32>,
    %c2_i32 = arith.constant 2 : i32
    %55 = arith.index_cast %c2_i32 : i32 to index
    %c0_24 = arith.constant 0 : index
    %c0_25 = arith.constant 0 : index
    %56 = vector.load %arg2[%55, %c0_24, %c0_25] : memref<16x8x32xf32, #tpu.memory_space<vmem>>, vector<1x8x32xf32>
    %57 = vector.shape_cast %56 : vector<1x8x32xf32> to vector<8x32xf32>
    %cst_26 = arith.constant dense<0.000000e+00> : vector<8x256xf32>
    %58 = tpu.matmul %57, %3, %cst_26 {dimension_numbers = #tpu.dot_dimension_numbers<[1], [0], [0], [1], [0, 0, 1, 1], [], []>} : vector<8x32xf32>, vector<32x256xf32>, vector<8x256xf32> -> vector<8x256xf32>
    %cst_27 = arith.constant dense<0.000000e+00> : vector<8x256xf32>
    %59 = tpu.matmul %39, %4, %cst_27 {dimension_numbers = #tpu.dot_dimension_numbers<[1], [0], [0], [1], [0, 0, 1, 1], [], []>} : vector<8x128xf32>, vector<128x256xf32>, vector<8x256xf32> -> vector<8x256xf32>
    %60 = arith.addf %58, %59 : vector<8x256xf32>
    %61 = arith.addf %60, %7 : vector<8x256xf32>
    %62 = vector.extract_strided_slice %61 {offsets = [0, 0], sizes = [8, 128], strides = [1, 1]} : vector<8x256xf32> to vector<8x128xf32>
    %63 = vector.extract_strided_slice %61 {offsets = [0, 128], sizes = [8, 128], strides = [1, 1]} : vector<8x256xf32> to vector<8x128xf32>
    %cst_28 = arith.constant dense<0xFF800000> : vector<8xf32>
    %64 = vector.multi_reduction <maximumf>, %63, %cst_28 [1] : vector<8x128xf32> to vector<8xf32>
    %65 = vector.shape_cast %64 : vector<8xf32> to vector<8x1xf32>
    %66 = vector.broadcast %65 : vector<8x1xf32> to vector<8x128xf32>
    %67 = arith.subf %63, %66 : vector<8x128xf32>
    %68 = math.exp %67 : vector<8x128xf32>
    %cst_29 = arith.constant dense<0.000000e+00> : vector<8xf32>
    %69 = vector.multi_reduction <add>, %68, %cst_29 [1] : vector<8x128xf32> to vector<8xf32>
    %70 = vector.shape_cast %69 : vector<8xf32> to vector<8x1xf32>
    %71 = math.log %70 : vector<8x1xf32>
    %72 = vector.broadcast %71 : vector<8x1xf32> to vector<8x128xf32>
    %73 = arith.subf %67, %72 : vector<8x128xf32>
    %74 = arith.index_cast %c2_i32 : i32 to index
    %c0_30 = arith.constant 0 : index
    %c0_31 = arith.constant 0 : index
    %75 = vector.load %arg7[%74, %c0_30, %c0_31] : memref<16x8x128xf32, #tpu.memory_space<vmem>>, vector<1x8x128xf32>
    %76 = vector.shape_cast %75 : vector<1x8x128xf32> to vector<8x128xf32>
    %77 = vector.shape_cast %73 : vector<8x128xf32> to vector<1x8x128xf32>
    tpu.vector_store %arg7[%74, %c0_30, %c0_31], %77 {strides = array<i32>} : memref<16x8x128xf32, #tpu.memory_space<vmem>>, vector<1x8x128xf32>,
    %c3_i32 = arith.constant 3 : i32
    %78 = arith.index_cast %c3_i32 : i32 to index
    %c0_32 = arith.constant 0 : index
    %c0_33 = arith.constant 0 : index
    %79 = vector.load %arg2[%78, %c0_32, %c0_33] : memref<16x8x32xf32, #tpu.memory_space<vmem>>, vector<1x8x32xf32>
    %80 = vector.shape_cast %79 : vector<1x8x32xf32> to vector<8x32xf32>
    %cst_34 = arith.constant dense<0.000000e+00> : vector<8x256xf32>
    %81 = tpu.matmul %80, %3, %cst_34 {dimension_numbers = #tpu.dot_dimension_numbers<[1], [0], [0], [1], [0, 0, 1, 1], [], []>} : vector<8x32xf32>, vector<32x256xf32>, vector<8x256xf32> -> vector<8x256xf32>
    %cst_35 = arith.constant dense<0.000000e+00> : vector<8x256xf32>
    %82 = tpu.matmul %62, %4, %cst_35 {dimension_numbers = #tpu.dot_dimension_numbers<[1], [0], [0], [1], [0, 0, 1, 1], [], []>} : vector<8x128xf32>, vector<128x256xf32>, vector<8x256xf32> -> vector<8x256xf32>
    %83 = arith.addf %81, %82 : vector<8x256xf32>
    %84 = arith.addf %83, %7 : vector<8x256xf32>
    %85 = vector.extract_strided_slice %84 {offsets = [0, 0], sizes = [8, 128], strides = [1, 1]} : vector<8x256xf32> to vector<8x128xf32>
    %86 = vector.extract_strided_slice %84 {offsets = [0, 128], sizes = [8, 128], strides = [1, 1]} : vector<8x256xf32> to vector<8x128xf32>
    %cst_36 = arith.constant dense<0xFF800000> : vector<8xf32>
    %87 = vector.multi_reduction <maximumf>, %86, %cst_36 [1] : vector<8x128xf32> to vector<8xf32>
    %88 = vector.shape_cast %87 : vector<8xf32> to vector<8x1xf32>
    %89 = vector.broadcast %88 : vector<8x1xf32> to vector<8x128xf32>
    %90 = arith.subf %86, %89 : vector<8x128xf32>
    %91 = math.exp %90 : vector<8x128xf32>
    %cst_37 = arith.constant dense<0.000000e+00> : vector<8xf32>
    %92 = vector.multi_reduction <add>, %91, %cst_37 [1] : vector<8x128xf32> to vector<8xf32>
    %93 = vector.shape_cast %92 : vector<8xf32> to vector<8x1xf32>
    %94 = math.log %93 : vector<8x1xf32>
    %95 = vector.broadcast %94 : vector<8x1xf32> to vector<8x128xf32>
    %96 = arith.subf %90, %95 : vector<8x128xf32>
    %97 = arith.index_cast %c3_i32 : i32 to index
    %c0_38 = arith.constant 0 : index
    %c0_39 = arith.constant 0 : index
    %98 = vector.load %arg7[%97, %c0_38, %c0_39] : memref<16x8x128xf32, #tpu.memory_space<vmem>>, vector<1x8x128xf32>
    %99 = vector.shape_cast %98 : vector<1x8x128xf32> to vector<8x128xf32>
    %100 = vector.shape_cast %96 : vector<8x128xf32> to vector<1x8x128xf32>
    tpu.vector_store %arg7[%97, %c0_38, %c0_39], %100 {strides = array<i32>} : memref<16x8x128xf32, #tpu.memory_space<vmem>>, vector<1x8x128xf32>,
    %c4_i32 = arith.constant 4 : i32
    %101 = arith.index_cast %c4_i32 : i32 to index
    %c0_40 = arith.constant 0 : index
    %c0_41 = arith.constant 0 : index
    %102 = vector.load %arg2[%101, %c0_40, %c0_41] : memref<16x8x32xf32, #tpu.memory_space<vmem>>, vector<1x8x32xf32>
    %103 = vector.shape_cast %102 : vector<1x8x32xf32> to vector<8x32xf32>
    %cst_42 = arith.constant dense<0.000000e+00> : vector<8x256xf32>
    %104 = tpu.matmul %103, %3, %cst_42 {dimension_numbers = #tpu.dot_dimension_numbers<[1], [0], [0], [1], [0, 0, 1, 1], [], []>} : vector<8x32xf32>, vector<32x256xf32>, vector<8x256xf32> -> vector<8x256xf32>
    %cst_43 = arith.constant dense<0.000000e+00> : vector<8x256xf32>
    %105 = tpu.matmul %85, %4, %cst_43 {dimension_numbers = #tpu.dot_dimension_numbers<[1], [0], [0], [1], [0, 0, 1, 1], [], []>} : vector<8x128xf32>, vector<128x256xf32>, vector<8x256xf32> -> vector<8x256xf32>
    %106 = arith.addf %104, %105 : vector<8x256xf32>
    %107 = arith.addf %106, %7 : vector<8x256xf32>
    %108 = vector.extract_strided_slice %107 {offsets = [0, 0], sizes = [8, 128], strides = [1, 1]} : vector<8x256xf32> to vector<8x128xf32>
    %109 = vector.extract_strided_slice %107 {offsets = [0, 128], sizes = [8, 128], strides = [1, 1]} : vector<8x256xf32> to vector<8x128xf32>
    %cst_44 = arith.constant dense<0xFF800000> : vector<8xf32>
    %110 = vector.multi_reduction <maximumf>, %109, %cst_44 [1] : vector<8x128xf32> to vector<8xf32>
    %111 = vector.shape_cast %110 : vector<8xf32> to vector<8x1xf32>
    %112 = vector.broadcast %111 : vector<8x1xf32> to vector<8x128xf32>
    %113 = arith.subf %109, %112 : vector<8x128xf32>
    %114 = math.exp %113 : vector<8x128xf32>
    %cst_45 = arith.constant dense<0.000000e+00> : vector<8xf32>
    %115 = vector.multi_reduction <add>, %114, %cst_45 [1] : vector<8x128xf32> to vector<8xf32>
    %116 = vector.shape_cast %115 : vector<8xf32> to vector<8x1xf32>
    %117 = math.log %116 : vector<8x1xf32>
    %118 = vector.broadcast %117 : vector<8x1xf32> to vector<8x128xf32>
    %119 = arith.subf %113, %118 : vector<8x128xf32>
    %120 = arith.index_cast %c4_i32 : i32 to index
    %c0_46 = arith.constant 0 : index
    %c0_47 = arith.constant 0 : index
    %121 = vector.load %arg7[%120, %c0_46, %c0_47] : memref<16x8x128xf32, #tpu.memory_space<vmem>>, vector<1x8x128xf32>
    %122 = vector.shape_cast %121 : vector<1x8x128xf32> to vector<8x128xf32>
    %123 = vector.shape_cast %119 : vector<8x128xf32> to vector<1x8x128xf32>
    tpu.vector_store %arg7[%120, %c0_46, %c0_47], %123 {strides = array<i32>} : memref<16x8x128xf32, #tpu.memory_space<vmem>>, vector<1x8x128xf32>,
    %c5_i32 = arith.constant 5 : i32
    %124 = arith.index_cast %c5_i32 : i32 to index
    %c0_48 = arith.constant 0 : index
    %c0_49 = arith.constant 0 : index
    %125 = vector.load %arg2[%124, %c0_48, %c0_49] : memref<16x8x32xf32, #tpu.memory_space<vmem>>, vector<1x8x32xf32>
    %126 = vector.shape_cast %125 : vector<1x8x32xf32> to vector<8x32xf32>
    %cst_50 = arith.constant dense<0.000000e+00> : vector<8x256xf32>
    %127 = tpu.matmul %126, %3, %cst_50 {dimension_numbers = #tpu.dot_dimension_numbers<[1], [0], [0], [1], [0, 0, 1, 1], [], []>} : vector<8x32xf32>, vector<32x256xf32>, vector<8x256xf32> -> vector<8x256xf32>
    %cst_51 = arith.constant dense<0.000000e+00> : vector<8x256xf32>
    %128 = tpu.matmul %108, %4, %cst_51 {dimension_numbers = #tpu.dot_dimension_numbers<[1], [0], [0], [1], [0, 0, 1, 1], [], []>} : vector<8x128xf32>, vector<128x256xf32>, vector<8x256xf32> -> vector<8x256xf32>
    %129 = arith.addf %127, %128 : vector<8x256xf32>
    %130 = arith.addf %129, %7 : vector<8x256xf32>
    %131 = vector.extract_strided_slice %130 {offsets = [0, 0], sizes = [8, 128], strides = [1, 1]} : vector<8x256xf32> to vector<8x128xf32>
    %132 = vector.extract_strided_slice %130 {offsets = [0, 128], sizes = [8, 128], strides = [1, 1]} : vector<8x256xf32> to vector<8x128xf32>
    %cst_52 = arith.constant dense<0xFF800000> : vector<8xf32>
    %133 = vector.multi_reduction <maximumf>, %132, %cst_52 [1] : vector<8x128xf32> to vector<8xf32>
    %134 = vector.shape_cast %133 : vector<8xf32> to vector<8x1xf32>
    %135 = vector.broadcast %134 : vector<8x1xf32> to vector<8x128xf32>
    %136 = arith.subf %132, %135 : vector<8x128xf32>
    %137 = math.exp %136 : vector<8x128xf32>
    %cst_53 = arith.constant dense<0.000000e+00> : vector<8xf32>
    %138 = vector.multi_reduction <add>, %137, %cst_53 [1] : vector<8x128xf32> to vector<8xf32>
    %139 = vector.shape_cast %138 : vector<8xf32> to vector<8x1xf32>
    %140 = math.log %139 : vector<8x1xf32>
    %141 = vector.broadcast %140 : vector<8x1xf32> to vector<8x128xf32>
    %142 = arith.subf %136, %141 : vector<8x128xf32>
    %143 = arith.index_cast %c5_i32 : i32 to index
    %c0_54 = arith.constant 0 : index
    %c0_55 = arith.constant 0 : index
    %144 = vector.load %arg7[%143, %c0_54, %c0_55] : memref<16x8x128xf32, #tpu.memory_space<vmem>>, vector<1x8x128xf32>
    %145 = vector.shape_cast %144 : vector<1x8x128xf32> to vector<8x128xf32>
    %146 = vector.shape_cast %142 : vector<8x128xf32> to vector<1x8x128xf32>
    tpu.vector_store %arg7[%143, %c0_54, %c0_55], %146 {strides = array<i32>} : memref<16x8x128xf32, #tpu.memory_space<vmem>>, vector<1x8x128xf32>,
    %c6_i32 = arith.constant 6 : i32
    %147 = arith.index_cast %c6_i32 : i32 to index
    %c0_56 = arith.constant 0 : index
    %c0_57 = arith.constant 0 : index
    %148 = vector.load %arg2[%147, %c0_56, %c0_57] : memref<16x8x32xf32, #tpu.memory_space<vmem>>, vector<1x8x32xf32>
    %149 = vector.shape_cast %148 : vector<1x8x32xf32> to vector<8x32xf32>
    %cst_58 = arith.constant dense<0.000000e+00> : vector<8x256xf32>
    %150 = tpu.matmul %149, %3, %cst_58 {dimension_numbers = #tpu.dot_dimension_numbers<[1], [0], [0], [1], [0, 0, 1, 1], [], []>} : vector<8x32xf32>, vector<32x256xf32>, vector<8x256xf32> -> vector<8x256xf32>
    %cst_59 = arith.constant dense<0.000000e+00> : vector<8x256xf32>
    %151 = tpu.matmul %131, %4, %cst_59 {dimension_numbers = #tpu.dot_dimension_numbers<[1], [0], [0], [1], [0, 0, 1, 1], [], []>} : vector<8x128xf32>, vector<128x256xf32>, vector<8x256xf32> -> vector<8x256xf32>
    %152 = arith.addf %150, %151 : vector<8x256xf32>
    %153 = arith.addf %152, %7 : vector<8x256xf32>
    %154 = vector.extract_strided_slice %153 {offsets = [0, 0], sizes = [8, 128], strides = [1, 1]} : vector<8x256xf32> to vector<8x128xf32>
    %155 = vector.extract_strided_slice %153 {offsets = [0, 128], sizes = [8, 128], strides = [1, 1]} : vector<8x256xf32> to vector<8x128xf32>
    %cst_60 = arith.constant dense<0xFF800000> : vector<8xf32>
    %156 = vector.multi_reduction <maximumf>, %155, %cst_60 [1] : vector<8x128xf32> to vector<8xf32>
    %157 = vector.shape_cast %156 : vector<8xf32> to vector<8x1xf32>
    %158 = vector.broadcast %157 : vector<8x1xf32> to vector<8x128xf32>
    %159 = arith.subf %155, %158 : vector<8x128xf32>
    %160 = math.exp %159 : vector<8x128xf32>
    %cst_61 = arith.constant dense<0.000000e+00> : vector<8xf32>
    %161 = vector.multi_reduction <add>, %160, %cst_61 [1] : vector<8x128xf32> to vector<8xf32>
    %162 = vector.shape_cast %161 : vector<8xf32> to vector<8x1xf32>
    %163 = math.log %162 : vector<8x1xf32>
    %164 = vector.broadcast %163 : vector<8x1xf32> to vector<8x128xf32>
    %165 = arith.subf %159, %164 : vector<8x128xf32>
    %166 = arith.index_cast %c6_i32 : i32 to index
    %c0_62 = arith.constant 0 : index
    %c0_63 = arith.constant 0 : index
    %167 = vector.load %arg7[%166, %c0_62, %c0_63] : memref<16x8x128xf32, #tpu.memory_space<vmem>>, vector<1x8x128xf32>
    %168 = vector.shape_cast %167 : vector<1x8x128xf32> to vector<8x128xf32>
    %169 = vector.shape_cast %165 : vector<8x128xf32> to vector<1x8x128xf32>
    tpu.vector_store %arg7[%166, %c0_62, %c0_63], %169 {strides = array<i32>} : memref<16x8x128xf32, #tpu.memory_space<vmem>>, vector<1x8x128xf32>,
    %c7_i32 = arith.constant 7 : i32
    %170 = arith.index_cast %c7_i32 : i32 to index
    %c0_64 = arith.constant 0 : index
    %c0_65 = arith.constant 0 : index
    %171 = vector.load %arg2[%170, %c0_64, %c0_65] : memref<16x8x32xf32, #tpu.memory_space<vmem>>, vector<1x8x32xf32>
    %172 = vector.shape_cast %171 : vector<1x8x32xf32> to vector<8x32xf32>
    %cst_66 = arith.constant dense<0.000000e+00> : vector<8x256xf32>
    %173 = tpu.matmul %172, %3, %cst_66 {dimension_numbers = #tpu.dot_dimension_numbers<[1], [0], [0], [1], [0, 0, 1, 1], [], []>} : vector<8x32xf32>, vector<32x256xf32>, vector<8x256xf32> -> vector<8x256xf32>
    %cst_67 = arith.constant dense<0.000000e+00> : vector<8x256xf32>
    %174 = tpu.matmul %154, %4, %cst_67 {dimension_numbers = #tpu.dot_dimension_numbers<[1], [0], [0], [1], [0, 0, 1, 1], [], []>} : vector<8x128xf32>, vector<128x256xf32>, vector<8x256xf32> -> vector<8x256xf32>
    %175 = arith.addf %173, %174 : vector<8x256xf32>
    %176 = arith.addf %175, %7 : vector<8x256xf32>
    %177 = vector.extract_strided_slice %176 {offsets = [0, 0], sizes = [8, 128], strides = [1, 1]} : vector<8x256xf32> to vector<8x128xf32>
    %178 = vector.extract_strided_slice %176 {offsets = [0, 128], sizes = [8, 128], strides = [1, 1]} : vector<8x256xf32> to vector<8x128xf32>
    %cst_68 = arith.constant dense<0xFF800000> : vector<8xf32>
    %179 = vector.multi_reduction <maximumf>, %178, %cst_68 [1] : vector<8x128xf32> to vector<8xf32>
    %180 = vector.shape_cast %179 : vector<8xf32> to vector<8x1xf32>
    %181 = vector.broadcast %180 : vector<8x1xf32> to vector<8x128xf32>
    %182 = arith.subf %178, %181 : vector<8x128xf32>
    %183 = math.exp %182 : vector<8x128xf32>
    %cst_69 = arith.constant dense<0.000000e+00> : vector<8xf32>
    %184 = vector.multi_reduction <add>, %183, %cst_69 [1] : vector<8x128xf32> to vector<8xf32>
    %185 = vector.shape_cast %184 : vector<8xf32> to vector<8x1xf32>
    %186 = math.log %185 : vector<8x1xf32>
    %187 = vector.broadcast %186 : vector<8x1xf32> to vector<8x128xf32>
    %188 = arith.subf %182, %187 : vector<8x128xf32>
    %189 = arith.index_cast %c7_i32 : i32 to index
    %c0_70 = arith.constant 0 : index
    %c0_71 = arith.constant 0 : index
    %190 = vector.load %arg7[%189, %c0_70, %c0_71] : memref<16x8x128xf32, #tpu.memory_space<vmem>>, vector<1x8x128xf32>
    %191 = vector.shape_cast %190 : vector<1x8x128xf32> to vector<8x128xf32>
    %192 = vector.shape_cast %188 : vector<8x128xf32> to vector<1x8x128xf32>
    tpu.vector_store %arg7[%189, %c0_70, %c0_71], %192 {strides = array<i32>} : memref<16x8x128xf32, #tpu.memory_space<vmem>>, vector<1x8x128xf32>,
    %c8_i32 = arith.constant 8 : i32
    %193 = arith.index_cast %c8_i32 : i32 to index
    %c0_72 = arith.constant 0 : index
    %c0_73 = arith.constant 0 : index
    %194 = vector.load %arg2[%193, %c0_72, %c0_73] : memref<16x8x32xf32, #tpu.memory_space<vmem>>, vector<1x8x32xf32>
    %195 = vector.shape_cast %194 : vector<1x8x32xf32> to vector<8x32xf32>
    %cst_74 = arith.constant dense<0.000000e+00> : vector<8x256xf32>
    %196 = tpu.matmul %195, %3, %cst_74 {dimension_numbers = #tpu.dot_dimension_numbers<[1], [0], [0], [1], [0, 0, 1, 1], [], []>} : vector<8x32xf32>, vector<32x256xf32>, vector<8x256xf32> -> vector<8x256xf32>
    %cst_75 = arith.constant dense<0.000000e+00> : vector<8x256xf32>
    %197 = tpu.matmul %177, %4, %cst_75 {dimension_numbers = #tpu.dot_dimension_numbers<[1], [0], [0], [1], [0, 0, 1, 1], [], []>} : vector<8x128xf32>, vector<128x256xf32>, vector<8x256xf32> -> vector<8x256xf32>
    %198 = arith.addf %196, %197 : vector<8x256xf32>
    %199 = arith.addf %198, %7 : vector<8x256xf32>
    %200 = vector.extract_strided_slice %199 {offsets = [0, 0], sizes = [8, 128], strides = [1, 1]} : vector<8x256xf32> to vector<8x128xf32>
    %201 = vector.extract_strided_slice %199 {offsets = [0, 128], sizes = [8, 128], strides = [1, 1]} : vector<8x256xf32> to vector<8x128xf32>
    %cst_76 = arith.constant dense<0xFF800000> : vector<8xf32>
    %202 = vector.multi_reduction <maximumf>, %201, %cst_76 [1] : vector<8x128xf32> to vector<8xf32>
    %203 = vector.shape_cast %202 : vector<8xf32> to vector<8x1xf32>
    %204 = vector.broadcast %203 : vector<8x1xf32> to vector<8x128xf32>
    %205 = arith.subf %201, %204 : vector<8x128xf32>
    %206 = math.exp %205 : vector<8x128xf32>
    %cst_77 = arith.constant dense<0.000000e+00> : vector<8xf32>
    %207 = vector.multi_reduction <add>, %206, %cst_77 [1] : vector<8x128xf32> to vector<8xf32>
    %208 = vector.shape_cast %207 : vector<8xf32> to vector<8x1xf32>
    %209 = math.log %208 : vector<8x1xf32>
    %210 = vector.broadcast %209 : vector<8x1xf32> to vector<8x128xf32>
    %211 = arith.subf %205, %210 : vector<8x128xf32>
    %212 = arith.index_cast %c8_i32 : i32 to index
    %c0_78 = arith.constant 0 : index
    %c0_79 = arith.constant 0 : index
    %213 = vector.load %arg7[%212, %c0_78, %c0_79] : memref<16x8x128xf32, #tpu.memory_space<vmem>>, vector<1x8x128xf32>
    %214 = vector.shape_cast %213 : vector<1x8x128xf32> to vector<8x128xf32>
    %215 = vector.shape_cast %211 : vector<8x128xf32> to vector<1x8x128xf32>
    tpu.vector_store %arg7[%212, %c0_78, %c0_79], %215 {strides = array<i32>} : memref<16x8x128xf32, #tpu.memory_space<vmem>>, vector<1x8x128xf32>,
    %c9_i32 = arith.constant 9 : i32
    %216 = arith.index_cast %c9_i32 : i32 to index
    %c0_80 = arith.constant 0 : index
    %c0_81 = arith.constant 0 : index
    %217 = vector.load %arg2[%216, %c0_80, %c0_81] : memref<16x8x32xf32, #tpu.memory_space<vmem>>, vector<1x8x32xf32>
    %218 = vector.shape_cast %217 : vector<1x8x32xf32> to vector<8x32xf32>
    %cst_82 = arith.constant dense<0.000000e+00> : vector<8x256xf32>
    %219 = tpu.matmul %218, %3, %cst_82 {dimension_numbers = #tpu.dot_dimension_numbers<[1], [0], [0], [1], [0, 0, 1, 1], [], []>} : vector<8x32xf32>, vector<32x256xf32>, vector<8x256xf32> -> vector<8x256xf32>
    %cst_83 = arith.constant dense<0.000000e+00> : vector<8x256xf32>
    %220 = tpu.matmul %200, %4, %cst_83 {dimension_numbers = #tpu.dot_dimension_numbers<[1], [0], [0], [1], [0, 0, 1, 1], [], []>} : vector<8x128xf32>, vector<128x256xf32>, vector<8x256xf32> -> vector<8x256xf32>
    %221 = arith.addf %219, %220 : vector<8x256xf32>
    %222 = arith.addf %221, %7 : vector<8x256xf32>
    %223 = vector.extract_strided_slice %222 {offsets = [0, 0], sizes = [8, 128], strides = [1, 1]} : vector<8x256xf32> to vector<8x128xf32>
    %224 = vector.extract_strided_slice %222 {offsets = [0, 128], sizes = [8, 128], strides = [1, 1]} : vector<8x256xf32> to vector<8x128xf32>
    %cst_84 = arith.constant dense<0xFF800000> : vector<8xf32>
    %225 = vector.multi_reduction <maximumf>, %224, %cst_84 [1] : vector<8x128xf32> to vector<8xf32>
    %226 = vector.shape_cast %225 : vector<8xf32> to vector<8x1xf32>
    %227 = vector.broadcast %226 : vector<8x1xf32> to vector<8x128xf32>
    %228 = arith.subf %224, %227 : vector<8x128xf32>
    %229 = math.exp %228 : vector<8x128xf32>
    %cst_85 = arith.constant dense<0.000000e+00> : vector<8xf32>
    %230 = vector.multi_reduction <add>, %229, %cst_85 [1] : vector<8x128xf32> to vector<8xf32>
    %231 = vector.shape_cast %230 : vector<8xf32> to vector<8x1xf32>
    %232 = math.log %231 : vector<8x1xf32>
    %233 = vector.broadcast %232 : vector<8x1xf32> to vector<8x128xf32>
    %234 = arith.subf %228, %233 : vector<8x128xf32>
    %235 = arith.index_cast %c9_i32 : i32 to index
    %c0_86 = arith.constant 0 : index
    %c0_87 = arith.constant 0 : index
    %236 = vector.load %arg7[%235, %c0_86, %c0_87] : memref<16x8x128xf32, #tpu.memory_space<vmem>>, vector<1x8x128xf32>
    %237 = vector.shape_cast %236 : vector<1x8x128xf32> to vector<8x128xf32>
    %238 = vector.shape_cast %234 : vector<8x128xf32> to vector<1x8x128xf32>
    tpu.vector_store %arg7[%235, %c0_86, %c0_87], %238 {strides = array<i32>} : memref<16x8x128xf32, #tpu.memory_space<vmem>>, vector<1x8x128xf32>,
    %c10_i32 = arith.constant 10 : i32
    %239 = arith.index_cast %c10_i32 : i32 to index
    %c0_88 = arith.constant 0 : index
    %c0_89 = arith.constant 0 : index
    %240 = vector.load %arg2[%239, %c0_88, %c0_89] : memref<16x8x32xf32, #tpu.memory_space<vmem>>, vector<1x8x32xf32>
    %241 = vector.shape_cast %240 : vector<1x8x32xf32> to vector<8x32xf32>
    %cst_90 = arith.constant dense<0.000000e+00> : vector<8x256xf32>
    %242 = tpu.matmul %241, %3, %cst_90 {dimension_numbers = #tpu.dot_dimension_numbers<[1], [0], [0], [1], [0, 0, 1, 1], [], []>} : vector<8x32xf32>, vector<32x256xf32>, vector<8x256xf32> -> vector<8x256xf32>
    %cst_91 = arith.constant dense<0.000000e+00> : vector<8x256xf32>
    %243 = tpu.matmul %223, %4, %cst_91 {dimension_numbers = #tpu.dot_dimension_numbers<[1], [0], [0], [1], [0, 0, 1, 1], [], []>} : vector<8x128xf32>, vector<128x256xf32>, vector<8x256xf32> -> vector<8x256xf32>
    %244 = arith.addf %242, %243 : vector<8x256xf32>
    %245 = arith.addf %244, %7 : vector<8x256xf32>
    %246 = vector.extract_strided_slice %245 {offsets = [0, 0], sizes = [8, 128], strides = [1, 1]} : vector<8x256xf32> to vector<8x128xf32>
    %247 = vector.extract_strided_slice %245 {offsets = [0, 128], sizes = [8, 128], strides = [1, 1]} : vector<8x256xf32> to vector<8x128xf32>
    %cst_92 = arith.constant dense<0xFF800000> : vector<8xf32>
    %248 = vector.multi_reduction <maximumf>, %247, %cst_92 [1] : vector<8x128xf32> to vector<8xf32>
    %249 = vector.shape_cast %248 : vector<8xf32> to vector<8x1xf32>
    %250 = vector.broadcast %249 : vector<8x1xf32> to vector<8x128xf32>
    %251 = arith.subf %247, %250 : vector<8x128xf32>
    %252 = math.exp %251 : vector<8x128xf32>
    %cst_93 = arith.constant dense<0.000000e+00> : vector<8xf32>
    %253 = vector.multi_reduction <add>, %252, %cst_93 [1] : vector<8x128xf32> to vector<8xf32>
    %254 = vector.shape_cast %253 : vector<8xf32> to vector<8x1xf32>
    %255 = math.log %254 : vector<8x1xf32>
    %256 = vector.broadcast %255 : vector<8x1xf32> to vector<8x128xf32>
    %257 = arith.subf %251, %256 : vector<8x128xf32>
    %258 = arith.index_cast %c10_i32 : i32 to index
    %c0_94 = arith.constant 0 : index
    %c0_95 = arith.constant 0 : index
    %259 = vector.load %arg7[%258, %c0_94, %c0_95] : memref<16x8x128xf32, #tpu.memory_space<vmem>>, vector<1x8x128xf32>
    %260 = vector.shape_cast %259 : vector<1x8x128xf32> to vector<8x128xf32>
    %261 = vector.shape_cast %257 : vector<8x128xf32> to vector<1x8x128xf32>
    tpu.vector_store %arg7[%258, %c0_94, %c0_95], %261 {strides = array<i32>} : memref<16x8x128xf32, #tpu.memory_space<vmem>>, vector<1x8x128xf32>,
    %c11_i32 = arith.constant 11 : i32
    %262 = arith.index_cast %c11_i32 : i32 to index
    %c0_96 = arith.constant 0 : index
    %c0_97 = arith.constant 0 : index
    %263 = vector.load %arg2[%262, %c0_96, %c0_97] : memref<16x8x32xf32, #tpu.memory_space<vmem>>, vector<1x8x32xf32>
    %264 = vector.shape_cast %263 : vector<1x8x32xf32> to vector<8x32xf32>
    %cst_98 = arith.constant dense<0.000000e+00> : vector<8x256xf32>
    %265 = tpu.matmul %264, %3, %cst_98 {dimension_numbers = #tpu.dot_dimension_numbers<[1], [0], [0], [1], [0, 0, 1, 1], [], []>} : vector<8x32xf32>, vector<32x256xf32>, vector<8x256xf32> -> vector<8x256xf32>
    %cst_99 = arith.constant dense<0.000000e+00> : vector<8x256xf32>
    %266 = tpu.matmul %246, %4, %cst_99 {dimension_numbers = #tpu.dot_dimension_numbers<[1], [0], [0], [1], [0, 0, 1, 1], [], []>} : vector<8x128xf32>, vector<128x256xf32>, vector<8x256xf32> -> vector<8x256xf32>
    %267 = arith.addf %265, %266 : vector<8x256xf32>
    %268 = arith.addf %267, %7 : vector<8x256xf32>
    %269 = vector.extract_strided_slice %268 {offsets = [0, 0], sizes = [8, 128], strides = [1, 1]} : vector<8x256xf32> to vector<8x128xf32>
    %270 = vector.extract_strided_slice %268 {offsets = [0, 128], sizes = [8, 128], strides = [1, 1]} : vector<8x256xf32> to vector<8x128xf32>
    %cst_100 = arith.constant dense<0xFF800000> : vector<8xf32>
    %271 = vector.multi_reduction <maximumf>, %270, %cst_100 [1] : vector<8x128xf32> to vector<8xf32>
    %272 = vector.shape_cast %271 : vector<8xf32> to vector<8x1xf32>
    %273 = vector.broadcast %272 : vector<8x1xf32> to vector<8x128xf32>
    %274 = arith.subf %270, %273 : vector<8x128xf32>
    %275 = math.exp %274 : vector<8x128xf32>
    %cst_101 = arith.constant dense<0.000000e+00> : vector<8xf32>
    %276 = vector.multi_reduction <add>, %275, %cst_101 [1] : vector<8x128xf32> to vector<8xf32>
    %277 = vector.shape_cast %276 : vector<8xf32> to vector<8x1xf32>
    %278 = math.log %277 : vector<8x1xf32>
    %279 = vector.broadcast %278 : vector<8x1xf32> to vector<8x128xf32>
    %280 = arith.subf %274, %279 : vector<8x128xf32>
    %281 = arith.index_cast %c11_i32 : i32 to index
    %c0_102 = arith.constant 0 : index
    %c0_103 = arith.constant 0 : index
    %282 = vector.load %arg7[%281, %c0_102, %c0_103] : memref<16x8x128xf32, #tpu.memory_space<vmem>>, vector<1x8x128xf32>
    %283 = vector.shape_cast %282 : vector<1x8x128xf32> to vector<8x128xf32>
    %284 = vector.shape_cast %280 : vector<8x128xf32> to vector<1x8x128xf32>
    tpu.vector_store %arg7[%281, %c0_102, %c0_103], %284 {strides = array<i32>} : memref<16x8x128xf32, #tpu.memory_space<vmem>>, vector<1x8x128xf32>,
    %c12_i32 = arith.constant 12 : i32
    %285 = arith.index_cast %c12_i32 : i32 to index
    %c0_104 = arith.constant 0 : index
    %c0_105 = arith.constant 0 : index
    %286 = vector.load %arg2[%285, %c0_104, %c0_105] : memref<16x8x32xf32, #tpu.memory_space<vmem>>, vector<1x8x32xf32>
    %287 = vector.shape_cast %286 : vector<1x8x32xf32> to vector<8x32xf32>
    %cst_106 = arith.constant dense<0.000000e+00> : vector<8x256xf32>
    %288 = tpu.matmul %287, %3, %cst_106 {dimension_numbers = #tpu.dot_dimension_numbers<[1], [0], [0], [1], [0, 0, 1, 1], [], []>} : vector<8x32xf32>, vector<32x256xf32>, vector<8x256xf32> -> vector<8x256xf32>
    %cst_107 = arith.constant dense<0.000000e+00> : vector<8x256xf32>
    %289 = tpu.matmul %269, %4, %cst_107 {dimension_numbers = #tpu.dot_dimension_numbers<[1], [0], [0], [1], [0, 0, 1, 1], [], []>} : vector<8x128xf32>, vector<128x256xf32>, vector<8x256xf32> -> vector<8x256xf32>
    %290 = arith.addf %288, %289 : vector<8x256xf32>
    %291 = arith.addf %290, %7 : vector<8x256xf32>
    %292 = vector.extract_strided_slice %291 {offsets = [0, 0], sizes = [8, 128], strides = [1, 1]} : vector<8x256xf32> to vector<8x128xf32>
    %293 = vector.extract_strided_slice %291 {offsets = [0, 128], sizes = [8, 128], strides = [1, 1]} : vector<8x256xf32> to vector<8x128xf32>
    %cst_108 = arith.constant dense<0xFF800000> : vector<8xf32>
    %294 = vector.multi_reduction <maximumf>, %293, %cst_108 [1] : vector<8x128xf32> to vector<8xf32>
    %295 = vector.shape_cast %294 : vector<8xf32> to vector<8x1xf32>
    %296 = vector.broadcast %295 : vector<8x1xf32> to vector<8x128xf32>
    %297 = arith.subf %293, %296 : vector<8x128xf32>
    %298 = math.exp %297 : vector<8x128xf32>
    %cst_109 = arith.constant dense<0.000000e+00> : vector<8xf32>
    %299 = vector.multi_reduction <add>, %298, %cst_109 [1] : vector<8x128xf32> to vector<8xf32>
    %300 = vector.shape_cast %299 : vector<8xf32> to vector<8x1xf32>
    %301 = math.log %300 : vector<8x1xf32>
    %302 = vector.broadcast %301 : vector<8x1xf32> to vector<8x128xf32>
    %303 = arith.subf %297, %302 : vector<8x128xf32>
    %304 = arith.index_cast %c12_i32 : i32 to index
    %c0_110 = arith.constant 0 : index
    %c0_111 = arith.constant 0 : index
    %305 = vector.load %arg7[%304, %c0_110, %c0_111] : memref<16x8x128xf32, #tpu.memory_space<vmem>>, vector<1x8x128xf32>
    %306 = vector.shape_cast %305 : vector<1x8x128xf32> to vector<8x128xf32>
    %307 = vector.shape_cast %303 : vector<8x128xf32> to vector<1x8x128xf32>
    tpu.vector_store %arg7[%304, %c0_110, %c0_111], %307 {strides = array<i32>} : memref<16x8x128xf32, #tpu.memory_space<vmem>>, vector<1x8x128xf32>,
    %c13_i32 = arith.constant 13 : i32
    %308 = arith.index_cast %c13_i32 : i32 to index
    %c0_112 = arith.constant 0 : index
    %c0_113 = arith.constant 0 : index
    %309 = vector.load %arg2[%308, %c0_112, %c0_113] : memref<16x8x32xf32, #tpu.memory_space<vmem>>, vector<1x8x32xf32>
    %310 = vector.shape_cast %309 : vector<1x8x32xf32> to vector<8x32xf32>
    %cst_114 = arith.constant dense<0.000000e+00> : vector<8x256xf32>
    %311 = tpu.matmul %310, %3, %cst_114 {dimension_numbers = #tpu.dot_dimension_numbers<[1], [0], [0], [1], [0, 0, 1, 1], [], []>} : vector<8x32xf32>, vector<32x256xf32>, vector<8x256xf32> -> vector<8x256xf32>
    %cst_115 = arith.constant dense<0.000000e+00> : vector<8x256xf32>
    %312 = tpu.matmul %292, %4, %cst_115 {dimension_numbers = #tpu.dot_dimension_numbers<[1], [0], [0], [1], [0, 0, 1, 1], [], []>} : vector<8x128xf32>, vector<128x256xf32>, vector<8x256xf32> -> vector<8x256xf32>
    %313 = arith.addf %311, %312 : vector<8x256xf32>
    %314 = arith.addf %313, %7 : vector<8x256xf32>
    %315 = vector.extract_strided_slice %314 {offsets = [0, 0], sizes = [8, 128], strides = [1, 1]} : vector<8x256xf32> to vector<8x128xf32>
    %316 = vector.extract_strided_slice %314 {offsets = [0, 128], sizes = [8, 128], strides = [1, 1]} : vector<8x256xf32> to vector<8x128xf32>
    %cst_116 = arith.constant dense<0xFF800000> : vector<8xf32>
    %317 = vector.multi_reduction <maximumf>, %316, %cst_116 [1] : vector<8x128xf32> to vector<8xf32>
    %318 = vector.shape_cast %317 : vector<8xf32> to vector<8x1xf32>
    %319 = vector.broadcast %318 : vector<8x1xf32> to vector<8x128xf32>
    %320 = arith.subf %316, %319 : vector<8x128xf32>
    %321 = math.exp %320 : vector<8x128xf32>
    %cst_117 = arith.constant dense<0.000000e+00> : vector<8xf32>
    %322 = vector.multi_reduction <add>, %321, %cst_117 [1] : vector<8x128xf32> to vector<8xf32>
    %323 = vector.shape_cast %322 : vector<8xf32> to vector<8x1xf32>
    %324 = math.log %323 : vector<8x1xf32>
    %325 = vector.broadcast %324 : vector<8x1xf32> to vector<8x128xf32>
    %326 = arith.subf %320, %325 : vector<8x128xf32>
    %327 = arith.index_cast %c13_i32 : i32 to index
    %c0_118 = arith.constant 0 : index
    %c0_119 = arith.constant 0 : index
    %328 = vector.load %arg7[%327, %c0_118, %c0_119] : memref<16x8x128xf32, #tpu.memory_space<vmem>>, vector<1x8x128xf32>
    %329 = vector.shape_cast %328 : vector<1x8x128xf32> to vector<8x128xf32>
    %330 = vector.shape_cast %326 : vector<8x128xf32> to vector<1x8x128xf32>
    tpu.vector_store %arg7[%327, %c0_118, %c0_119], %330 {strides = array<i32>} : memref<16x8x128xf32, #tpu.memory_space<vmem>>, vector<1x8x128xf32>,
    %c14_i32 = arith.constant 14 : i32
    %331 = arith.index_cast %c14_i32 : i32 to index
    %c0_120 = arith.constant 0 : index
    %c0_121 = arith.constant 0 : index
    %332 = vector.load %arg2[%331, %c0_120, %c0_121] : memref<16x8x32xf32, #tpu.memory_space<vmem>>, vector<1x8x32xf32>
    %333 = vector.shape_cast %332 : vector<1x8x32xf32> to vector<8x32xf32>
    %cst_122 = arith.constant dense<0.000000e+00> : vector<8x256xf32>
    %334 = tpu.matmul %333, %3, %cst_122 {dimension_numbers = #tpu.dot_dimension_numbers<[1], [0], [0], [1], [0, 0, 1, 1], [], []>} : vector<8x32xf32>, vector<32x256xf32>, vector<8x256xf32> -> vector<8x256xf32>
    %cst_123 = arith.constant dense<0.000000e+00> : vector<8x256xf32>
    %335 = tpu.matmul %315, %4, %cst_123 {dimension_numbers = #tpu.dot_dimension_numbers<[1], [0], [0], [1], [0, 0, 1, 1], [], []>} : vector<8x128xf32>, vector<128x256xf32>, vector<8x256xf32> -> vector<8x256xf32>
    %336 = arith.addf %334, %335 : vector<8x256xf32>
    %337 = arith.addf %336, %7 : vector<8x256xf32>
    %338 = vector.extract_strided_slice %337 {offsets = [0, 0], sizes = [8, 128], strides = [1, 1]} : vector<8x256xf32> to vector<8x128xf32>
    %339 = vector.extract_strided_slice %337 {offsets = [0, 128], sizes = [8, 128], strides = [1, 1]} : vector<8x256xf32> to vector<8x128xf32>
    %cst_124 = arith.constant dense<0xFF800000> : vector<8xf32>
    %340 = vector.multi_reduction <maximumf>, %339, %cst_124 [1] : vector<8x128xf32> to vector<8xf32>
    %341 = vector.shape_cast %340 : vector<8xf32> to vector<8x1xf32>
    %342 = vector.broadcast %341 : vector<8x1xf32> to vector<8x128xf32>
    %343 = arith.subf %339, %342 : vector<8x128xf32>
    %344 = math.exp %343 : vector<8x128xf32>
    %cst_125 = arith.constant dense<0.000000e+00> : vector<8xf32>
    %345 = vector.multi_reduction <add>, %344, %cst_125 [1] : vector<8x128xf32> to vector<8xf32>
    %346 = vector.shape_cast %345 : vector<8xf32> to vector<8x1xf32>
    %347 = math.log %346 : vector<8x1xf32>
    %348 = vector.broadcast %347 : vector<8x1xf32> to vector<8x128xf32>
    %349 = arith.subf %343, %348 : vector<8x128xf32>
    %350 = arith.index_cast %c14_i32 : i32 to index
    %c0_126 = arith.constant 0 : index
    %c0_127 = arith.constant 0 : index
    %351 = vector.load %arg7[%350, %c0_126, %c0_127] : memref<16x8x128xf32, #tpu.memory_space<vmem>>, vector<1x8x128xf32>
    %352 = vector.shape_cast %351 : vector<1x8x128xf32> to vector<8x128xf32>
    %353 = vector.shape_cast %349 : vector<8x128xf32> to vector<1x8x128xf32>
    tpu.vector_store %arg7[%350, %c0_126, %c0_127], %353 {strides = array<i32>} : memref<16x8x128xf32, #tpu.memory_space<vmem>>, vector<1x8x128xf32>,
    %c15_i32 = arith.constant 15 : i32
    %354 = arith.index_cast %c15_i32 : i32 to index
    %c0_128 = arith.constant 0 : index
    %c0_129 = arith.constant 0 : index
    %355 = vector.load %arg2[%354, %c0_128, %c0_129] : memref<16x8x32xf32, #tpu.memory_space<vmem>>, vector<1x8x32xf32>
    %356 = vector.shape_cast %355 : vector<1x8x32xf32> to vector<8x32xf32>
    %cst_130 = arith.constant dense<0.000000e+00> : vector<8x256xf32>
    %357 = tpu.matmul %356, %3, %cst_130 {dimension_numbers = #tpu.dot_dimension_numbers<[1], [0], [0], [1], [0, 0, 1, 1], [], []>} : vector<8x32xf32>, vector<32x256xf32>, vector<8x256xf32> -> vector<8x256xf32>
    %cst_131 = arith.constant dense<0.000000e+00> : vector<8x256xf32>
    %358 = tpu.matmul %338, %4, %cst_131 {dimension_numbers = #tpu.dot_dimension_numbers<[1], [0], [0], [1], [0, 0, 1, 1], [], []>} : vector<8x128xf32>, vector<128x256xf32>, vector<8x256xf32> -> vector<8x256xf32>
    %359 = arith.addf %357, %358 : vector<8x256xf32>
    %360 = arith.addf %359, %7 : vector<8x256xf32>
    %361 = vector.extract_strided_slice %360 {offsets = [0, 0], sizes = [8, 128], strides = [1, 1]} : vector<8x256xf32> to vector<8x128xf32>
    %362 = vector.extract_strided_slice %360 {offsets = [0, 128], sizes = [8, 128], strides = [1, 1]} : vector<8x256xf32> to vector<8x128xf32>
    %cst_132 = arith.constant dense<0xFF800000> : vector<8xf32>
    %363 = vector.multi_reduction <maximumf>, %362, %cst_132 [1] : vector<8x128xf32> to vector<8xf32>
    %364 = vector.shape_cast %363 : vector<8xf32> to vector<8x1xf32>
    %365 = vector.broadcast %364 : vector<8x1xf32> to vector<8x128xf32>
    %366 = arith.subf %362, %365 : vector<8x128xf32>
    %367 = math.exp %366 : vector<8x128xf32>
    %cst_133 = arith.constant dense<0.000000e+00> : vector<8xf32>
    %368 = vector.multi_reduction <add>, %367, %cst_133 [1] : vector<8x128xf32> to vector<8xf32>
    %369 = vector.shape_cast %368 : vector<8xf32> to vector<8x1xf32>
    %370 = math.log %369 : vector<8x1xf32>
    %371 = vector.broadcast %370 : vector<8x1xf32> to vector<8x128xf32>
    %372 = arith.subf %366, %371 : vector<8x128xf32>
    %373 = arith.index_cast %c15_i32 : i32 to index
    %c0_134 = arith.constant 0 : index
    %c0_135 = arith.constant 0 : index
    %374 = vector.load %arg7[%373, %c0_134, %c0_135] : memref<16x8x128xf32, #tpu.memory_space<vmem>>, vector<1x8x128xf32>
    %375 = vector.shape_cast %374 : vector<1x8x128xf32> to vector<8x128xf32>
    %376 = vector.shape_cast %372 : vector<8x128xf32> to vector<1x8x128xf32>
    tpu.vector_store %arg7[%373, %c0_134, %c0_135], %376 {strides = array<i32>} : memref<16x8x128xf32, #tpu.memory_space<vmem>>, vector<1x8x128xf32>,
    %c16_i32 = arith.constant 16 : i32
    %c0_136 = arith.constant 0 : index
    %c0_137 = arith.constant 0 : index
    %377 = vector.load %arg9[%c0_136, %c0_137] : memref<8x128xf32, #tpu.memory_space<vmem>>, vector<8x128xf32>
    tpu.vector_store %arg9[%c0_136, %c0_137], %361 {strides = array<i32>} : memref<8x128xf32, #tpu.memory_space<vmem>>, vector<8x128xf32>,
    %c0_138 = arith.constant 0 : index
    %c0_139 = arith.constant 0 : index
    %378 = vector.load %arg8[%c0_138, %c0_139] : memref<8x128xf32, #tpu.memory_space<vmem>>, vector<8x128xf32>
    tpu.vector_store %arg8[%c0_138, %c0_139], %361 {strides = array<i32>} : memref<8x128xf32, #tpu.memory_space<vmem>>, vector<8x128xf32>,
    return
  }
  func.func @transform_0(%arg0: i32, %arg1: i32) -> (i32, i32, i32) {
    %c0_i32 = arith.constant 0 : i32
    %c0_i32_0 = arith.constant 0 : i32
    return %arg1, %arg0, %c0_i32 : i32, i32, i32
  }
  func.func @transform_1(%arg0: i32, %arg1: i32) -> (i32, i32) {
    %c0_i32 = arith.constant 0 : i32
    %c0_i32_0 = arith.constant 0 : i32
    return %arg0, %c0_i32 : i32, i32
  }
  func.func @transform_2(%arg0: i32, %arg1: i32) -> (i32, i32) {
    %c0_i32 = arith.constant 0 : i32
    %c0_i32_0 = arith.constant 0 : i32
    %c0_i32_1 = arith.constant 0 : i32
    return %c0_i32, %c0_i32_0 : i32, i32
  }
  func.func @transform_3(%arg0: i32, %arg1: i32) -> (i32, i32) {
    %c0_i32 = arith.constant 0 : i32
    %c0_i32_0 = arith.constant 0 : i32
    %c0_i32_1 = arith.constant 0 : i32
    return %c0_i32, %c0_i32_0 : i32, i32
  }
  func.func @transform_4(%arg0: i32, %arg1: i32) -> (i32, i32) {
    %c0_i32 = arith.constant 0 : i32
    %c0_i32_0 = arith.constant 0 : i32
    %c0_i32_1 = arith.constant 0 : i32
    return %c0_i32, %c0_i32_0 : i32, i32
  }
  func.func @transform_5(%arg0: i32, %arg1: i32) -> (i32, i32, i32) {
    %c0_i32 = arith.constant 0 : i32
    %c0_i32_0 = arith.constant 0 : i32
    return %arg1, %arg0, %c0_i32 : i32, i32, i32
  }
  func.func @transform_6(%arg0: i32, %arg1: i32) -> (i32, i32) {
    %c0_i32 = arith.constant 0 : i32
    %c0_i32_0 = arith.constant 0 : i32
    return %arg0, %c0_i32 : i32, i32
  }
}

</mosaic_0001>

<llo_original>
// kernel: rnn_sequence_forward.1
$region0: #{rnn_sequence_forward.1}
  #allocation0 [shape = 'u32[]', space=smem, size = 0x4, offset = 0x4, fixed_abs, tag = 'smem constant byte address 0x4 - core index']
  #allocation1 [shape = 'u32[72,128]{1,0:T(1,128)}', space=vmem, size = 0x9000, scoped, tag = 'internal scratch']
  #allocation2 [shape = 'f32[8,128]{1,0:T(8,128)}', space=vmem, size = 0x1000, scoped, tag = 'scratch operand']
  %s0 = inlined_call_operand.vmem [shape: f32[16,8,32], index: 0, kind: input, shape index: {}]
  %s1 = inlined_call_operand.vmem [shape: f32[8,128], index: 1, kind: input, shape index: {}]
  %s2 = inlined_call_operand.vmem [shape: f32[32,256], index: 2, kind: input, shape index: {}]
  %s3 = inlined_call_operand.vmem [shape: f32[128,256], index: 3, kind: input, shape index: {}]
  %s4 = inlined_call_operand.vmem [shape: f32[1,256], index: 4, kind: input, shape index: {}]
  %s5 = inlined_call_operand.hbm [shape: f32[16,8,128], index: 5, kind: output, shape index: {0}]
  %s6 = inlined_call_operand.hbm [shape: f32[8,128], index: 6, kind: output, shape index: {1}]
  %7 = xla_tuple %s5, %s6
  %s8 = sld [smem:[#allocation0]]
  $region42: #{rnn_sequence_forward.1} parent=0
    _
  %s10 = ssub.s32 1, %s8
  %s11 = scalar_select 0, %s10, %s8
  $region1: #{rnn_sequence_forward.1} parent=0
    #allocation3 [shape = 'u8[65536]{0}', space=vmem, size = 0x10000, scoped, tag = 'output window, operand 0, single buffered']
    #allocation4 [shape = 's32[1]{0}', space=sflag, size = 0x4, scoped, tag = 'scoped memory for rnn_sequence_forward.1']
    #allocation5 [shape = 'u8[4096]{0}', space=vmem, size = 0x1000, scoped, tag = 'output window, operand 1, single buffered']
    #allocation6 [shape = 's32[1]{0}', space=sflag, size = 0x4, scoped, tag = 'scoped memory for rnn_sequence_forward.1']
    %12 = vsyncpa [#allocation4], 0
    %13 = vsyncpa [#allocation6], 0
    // Predicated region
    $region2: #{rnn_sequence_forward.1} parent=1 // pred_check
      _
    $region3: #{rnn_sequence_forward.1} parent=1 // pred_check_branch
      %15 = sbr.rel (0) target = $region5
    $region4: #{rnn_sequence_forward.1} parent=1 // pred_region
      _
    $region5: #{rnn_sequence_forward.1} parent=1 // pred_fallthru
      _
    // Predicated region
    $region6: #{rnn_sequence_forward.1} parent=1 // pred_check
      _
    $region7: #{rnn_sequence_forward.1} parent=1 // pred_check_branch
      %17 = sbr.rel (0) target = $region9
    $region8: #{rnn_sequence_forward.1} parent=1 // pred_region
      _
    $region9: #{rnn_sequence_forward.1} parent=1 // pred_fallthru
      _
    // Predicated region
    $region10: #{rnn_sequence_forward.1} parent=1 // pred_check
      _
    $region11: #{rnn_sequence_forward.1} parent=1 // pred_check_branch
      %19 = sbr.rel (0) target = $region13
    $region12: #{rnn_sequence_forward.1} parent=1 // pred_region
      _
    $region13: #{rnn_sequence_forward.1} parent=1 // pred_fallthru
      _
    // Predicated region
    $region14: #{rnn_sequence_forward.1} parent=1 // pred_check
      _
    $region15: #{rnn_sequence_forward.1} parent=1 // pred_check_branch
      %21 = sbr.rel (0) target = $region17
    $region16: #{rnn_sequence_forward.1} parent=1 // pred_region
      _
    $region17: #{rnn_sequence_forward.1} parent=1 // pred_fallthru
      _
    // Predicated region
    $region18: #{rnn_sequence_forward.1} parent=1 // pred_check
      _
    $region19: #{rnn_sequence_forward.1} parent=1 // pred_check_branch
      %23 = sbr.rel (0) target = $region21
    $region20: #{rnn_sequence_forward.1} parent=1 // pred_region
      _
    $region21: #{rnn_sequence_forward.1} parent=1 // pred_fallthru
      _
    %p24 = scmp.eq.s32.totalorder 0, 0
    // Predicated region
    $region22: #{rnn_sequence_forward.1} parent=1 // pred_check
      %p25 = pneg %p24
    $region23: #{rnn_sequence_forward.1} parent=1 // pred_check_branch
      %27 = sbr.rel (%p25) target = $region25
    $region24: #{rnn_sequence_forward.1} parent=1 // pred_region
      %v28 = vld [vmem:[%s1] sm:$0xff]
      %29 = vst [vmem:[#allocation2] sm:$0xff] %v28
    $region25: #{rnn_sequence_forward.1} parent=1 // pred_fallthru
      _
    %v30 = vld [vmem:[%s2] sm:$0xff]
    %v31 = vld [vmem:[%s2 + $0x8] sm:$0xff]
    %v32 = vld [vmem:[%s2 + $0x10] sm:$0xff]
    %v33 = vld [vmem:[%s2 + $0x18] sm:$0xff]
    %v34 = vld [vmem:[%s2 + $0x20] sm:$0xff]
    %v35 = vld [vmem:[%s2 + $0x28] sm:$0xff]
    %v36 = vld [vmem:[%s2 + $0x30] sm:$0xff]
    %v37 = vld [vmem:[%s2 + $0x38] sm:$0xff]
    %v38 = vld [vmem:[%s3] sm:$0xff]
    %v39 = vld [vmem:[%s3 + $0x8] sm:$0xff]
    %v40 = vld [vmem:[%s3 + $0x10] sm:$0xff]
    %v41 = vld [vmem:[%s3 + $0x18] sm:$0xff]
    %v42 = vld [vmem:[%s3 + $0x20] sm:$0xff]
    %v43 = vld [vmem:[%s3 + $0x28] sm:$0xff]
    %v44 = vld [vmem:[%s3 + $0x30] sm:$0xff]
    %v45 = vld [vmem:[%s3 + $0x38] sm:$0xff]
    %v46 = vld [vmem:[%s3 + $0x40] sm:$0xff]
    %v47 = vld [vmem:[%s3 + $0x48] sm:$0xff]
    %v48 = vld [vmem:[%s3 + $0x50] sm:$0xff]
    %v49 = vld [vmem:[%s3 + $0x58] sm:$0xff]
    %v50 = vld [vmem:[%s3 + $0x60] sm:$0xff]
    %v51 = vld [vmem:[%s3 + $0x68] sm:$0xff]
    %v52 = vld [vmem:[%s3 + $0x70] sm:$0xff]
    %v53 = vld [vmem:[%s3 + $0x78] sm:$0xff]
    %v54 = vld [vmem:[%s3 + $0x80] sm:$0xff]
    %v55 = vld [vmem:[%s3 + $0x88] sm:$0xff]
    %v56 = vld [vmem:[%s3 + $0x90] sm:$0xff]
    %v57 = vld [vmem:[%s3 + $0x98] sm:$0xff]
    %v58 = vld [vmem:[%s3 + $0xa0] sm:$0xff]
    %v59 = vld [vmem:[%s3 + $0xa8] sm:$0xff]
    %v60 = vld [vmem:[%s3 + $0xb0] sm:$0xff]
    %v61 = vld [vmem:[%s3 + $0xb8] sm:$0xff]
    %v62 = vld [vmem:[%s3 + $0xc0] sm:$0xff]
    %v63 = vld [vmem:[%s3 + $0xc8] sm:$0xff]
    %v64 = vld [vmem:[%s3 + $0xd0] sm:$0xff]
    %v65 = vld [vmem:[%s3 + $0xd8] sm:$0xff]
    %v66 = vld [vmem:[%s3 + $0xe0] sm:$0xff]
    %v67 = vld [vmem:[%s3 + $0xe8] sm:$0xff]
    %v68 = vld [vmem:[%s3 + $0xf0] sm:$0xff]
    %v69 = vld [vmem:[%s3 + $0xf8] sm:$0xff]
    %v70 = vld [vmem:[%s4] sm:$0x3]
    %v72 = vperm.slane %v70, 0
    %v73 = vperm.slane %v70, 1
    %v76 = vld [vmem:[#allocation2] sm:$0xff]
    %v77 = vld [vmem:[%s0] sm:$0xff]
    %78 = vmatpush.msra.mxu0 %v68
    %79 = vmatpush.msra.mxu0 %v66
    %80 = vmatpush.msra.mxu0 %v64
    %81 = vmatpush.msra.mxu0 %v62
    %82 = vmatpush.msra.mxu0 %v60
    %83 = vmatpush.msra.mxu0 %v58
    %84 = vmatpush.msra.mxu0 %v56
    %85 = vmatpush.msra.mxu0 %v54
    %86 = vmatpush.msra.mxu0 %v52
    %87 = vmatpush.msra.mxu0 %v50
    %88 = vmatpush.msra.mxu0 %v48
    %89 = vmatpush.msra.mxu0 %v46
    %90 = vmatpush.msra.mxu0 %v44
    %91 = vmatpush.msra.mxu0 %v42
    %92 = vmatpush.msra.mxu0 %v40
    %93 = vmatpush.msra.mxu0 %v38
    %94 = vmatmul.f32.gmra.mxu0 %v76
    %v95 = vpop.f32.mrf.mxu0
    %v96 = vadd.f32 0.0, %v95
    %97 = vdwg.mxu0
    %98 = vmatpush.msra.mxu0 %v69
    %99 = vmatpush.msra.mxu0 %v67
    %100 = vmatpush.msra.mxu0 %v65
    %101 = vmatpush.msra.mxu0 %v63
    %102 = vmatpush.msra.mxu0 %v61
    %103 = vmatpush.msra.mxu0 %v59
    %104 = vmatpush.msra.mxu0 %v57
    %105 = vmatpush.msra.mxu0 %v55
    %106 = vmatpush.msra.mxu0 %v53
    %107 = vmatpush.msra.mxu0 %v51
    %108 = vmatpush.msra.mxu0 %v49
    %109 = vmatpush.msra.mxu0 %v47
    %110 = vmatpush.msra.mxu0 %v45
    %111 = vmatpush.msra.mxu0 %v43
    %112 = vmatpush.msra.mxu0 %v41
    %113 = vmatpush.msra.mxu0 %v39
    %114 = vmatmul.f32.gmra.mxu0 %v76
    %v115 = vpop.f32.mrf.mxu0
    %v116 = vadd.f32 0.0, %v115
    %117 = vdwg.mxu0
    %vm118 = vcmask 261120
    %v120 = vsel %vm118, %v77, 0
    %122 = vmatpush.msra.mxu0 0.0
    %123 = vmatpush.msra.mxu0 0.0
    %124 = vmatpush.msra.mxu0 0.0
    %125 = vmatpush.msra.mxu0 0.0
    %126 = vmatpush.msra.mxu0 0.0
    %127 = vmatpush.msra.mxu0 0.0
    %128 = vmatpush.msra.mxu0 0.0
    %129 = vmatpush.msra.mxu0 0.0
    %130 = vmatpush.msra.mxu0 0.0
    %131 = vmatpush.msra.mxu0 0.0
    %132 = vmatpush.msra.mxu0 0.0
    %133 = vmatpush.msra.mxu0 0.0
    %134 = vmatpush.msra.mxu0 %v36
    %135 = vmatpush.msra.mxu0 %v34
    %136 = vmatpush.msra.mxu0 %v32
    %137 = vmatpush.msra.mxu0 %v30
    %138 = vmatmul.f32.gmra.mxu0 %v120
    %v139 = vpop.f32.mrf.mxu0
    %v140 = vadd.f32 %v96, %v139
    %141 = vdwg.mxu0
    %142 = vmatpush.msra.mxu0 0.0
    %143 = vmatpush.msra.mxu0 0.0
    %144 = vmatpush.msra.mxu0 0.0
    %145 = vmatpush.msra.mxu0 0.0
    %146 = vmatpush.msra.mxu0 0.0
    %147 = vmatpush.msra.mxu0 0.0
    %148 = vmatpush.msra.mxu0 0.0
    %149 = vmatpush.msra.mxu0 0.0
    %150 = vmatpush.msra.mxu0 0.0
    %151 = vmatpush.msra.mxu0 0.0
    %152 = vmatpush.msra.mxu0 0.0
    %153 = vmatpush.msra.mxu0 0.0
    %154 = vmatpush.msra.mxu0 %v37
    %155 = vmatpush.msra.mxu0 %v35
    %156 = vmatpush.msra.mxu0 %v33
    %157 = vmatpush.msra.mxu0 %v31
    %158 = vmatmul.f32.gmra.mxu0 %v120
    %v159 = vpop.f32.mrf.mxu0
    %v160 = vadd.f32 %v116, %v159
    %161 = vdwg.mxu0
    %v162 = vadd.f32 %v140, %v72
    %v163 = vadd.f32 %v160, %v73
    %164 = vmax.xlane.f32.xlu0 %v163
    %v165 = vpop.xlane.xlu0 %164
    %v166 = vsub.f32 %v163, %v165
    %v167 = vmul.f32 %v166, 1.442695
    %v168 = vpow.pop %v167
    %169 = vadd.xlane.f32.xlu0 %v168
    %v170 = vpop.xlane.xlu0 %169
    %v171 = vlog2.pop %v170
    %v172 = vmul.f32 %v171, 0.6931472
    %v173 = vsub.f32 %v166, %v172
    %174 = vst [vmem:[#allocation3] sm:$0xff] %v173
    %s175 = scalar_lea.vmem %s0, 8
    %v176 = vld [vmem:[%s175] sm:$0xff]
    %177 = vmatpush.msra.mxu0 %v68
    %178 = vmatpush.msra.mxu0 %v66
    %179 = vmatpush.msra.mxu0 %v64
    %180 = vmatpush.msra.mxu0 %v62
    %181 = vmatpush.msra.mxu0 %v60
    %182 = vmatpush.msra.mxu0 %v58
    %183 = vmatpush.msra.mxu0 %v56
    %184 = vmatpush.msra.mxu0 %v54
    %185 = vmatpush.msra.mxu0 %v52
    %186 = vmatpush.msra.mxu0 %v50
    %187 = vmatpush.msra.mxu0 %v48
    %188 = vmatpush.msra.mxu0 %v46
    %189 = vmatpush.msra.mxu0 %v44
    %190 = vmatpush.msra.mxu0 %v42
    %191 = vmatpush.msra.mxu0 %v40
    %192 = vmatpush.msra.mxu0 %v38
    %193 = vmatmul.f32.gmra.mxu0 %v162
    %v194 = vpop.f32.mrf.mxu0
    %v195 = vadd.f32 0.0, %v194
    %196 = vdwg.mxu0
    %197 = vmatpush.msra.mxu0 %v69
    %198 = vmatpush.msra.mxu0 %v67
    %199 = vmatpush.msra.mxu0 %v65
    %200 = vmatpush.msra.mxu0 %v63
    %201 = vmatpush.msra.mxu0 %v61
    %202 = vmatpush.msra.mxu0 %v59
    %203 = vmatpush.msra.mxu0 %v57
    %204 = vmatpush.msra.mxu0 %v55
    %205 = vmatpush.msra.mxu0 %v53
    %206 = vmatpush.msra.mxu0 %v51
    %207 = vmatpush.msra.mxu0 %v49
    %208 = vmatpush.msra.mxu0 %v47
    %209 = vmatpush.msra.mxu0 %v45
    %210 = vmatpush.msra.mxu0 %v43
    %211 = vmatpush.msra.mxu0 %v41
    %212 = vmatpush.msra.mxu0 %v39
    %213 = vmatmul.f32.gmra.mxu0 %v162
    %v214 = vpop.f32.mrf.mxu0
    %v215 = vadd.f32 0.0, %v214
    %216 = vdwg.mxu0
    %v218 = vsel %vm118, %v176, 0
    %220 = vmatpush.msra.mxu0 0.0
    %221 = vmatpush.msra.mxu0 0.0
    %222 = vmatpush.msra.mxu0 0.0
    %223 = vmatpush.msra.mxu0 0.0
    %224 = vmatpush.msra.mxu0 0.0
    %225 = vmatpush.msra.mxu0 0.0
    %226 = vmatpush.msra.mxu0 0.0
    %227 = vmatpush.msra.mxu0 0.0
    %228 = vmatpush.msra.mxu0 0.0
    %229 = vmatpush.msra.mxu0 0.0
    %230 = vmatpush.msra.mxu0 0.0
    %231 = vmatpush.msra.mxu0 0.0
    %232 = vmatpush.msra.mxu0 %v36
    %233 = vmatpush.msra.mxu0 %v34
    %234 = vmatpush.msra.mxu0 %v32
    %235 = vmatpush.msra.mxu0 %v30
    %236 = vmatmul.f32.gmra.mxu0 %v218
    %v237 = vpop.f32.mrf.mxu0
    %v238 = vadd.f32 %v195, %v237
    %239 = vdwg.mxu0
    %240 = vmatpush.msra.mxu0 0.0
    %241 = vmatpush.msra.mxu0 0.0
    %242 = vmatpush.msra.mxu0 0.0
    %243 = vmatpush.msra.mxu0 0.0
    %244 = vmatpush.msra.mxu0 0.0
    %245 = vmatpush.msra.mxu0 0.0
    %246 = vmatpush.msra.mxu0 0.0
    %247 = vmatpush.msra.mxu0 0.0
    %248 = vmatpush.msra.mxu0 0.0
    %249 = vmatpush.msra.mxu0 0.0
    %250 = vmatpush.msra.mxu0 0.0
    %251 = vmatpush.msra.mxu0 0.0
    %252 = vmatpush.msra.mxu0 %v37
    %253 = vmatpush.msra.mxu0 %v35
    %254 = vmatpush.msra.mxu0 %v33
    %255 = vmatpush.msra.mxu0 %v31
    %256 = vmatmul.f32.gmra.mxu0 %v218
    %v257 = vpop.f32.mrf.mxu0
    %v258 = vadd.f32 %v215, %v257
    %259 = vdwg.mxu0
    %v260 = vadd.f32 %v238, %v72
    %v261 = vadd.f32 %v258, %v73
    %262 = vmax.xlane.f32.xlu0 %v261
    %v263 = vpop.xlane.xlu0 %262
    %v264 = vsub.f32 %v261, %v263
    %v265 = vmul.f32 %v264, 1.442695
    %v266 = vpow.pop %v265
    %267 = vadd.xlane.f32.xlu0 %v266
    %v268 = vpop.xlane.xlu0 %267
    %v269 = vlog2.pop %v268
    %v270 = vmul.f32 %v269, 0.6931472
    %v271 = vsub.f32 %v264, %v270
    %s272 = scalar_lea.vmem [#allocation3], 8
    %273 = vst [vmem:[%s272] sm:$0xff] %v271
    %s274 = scalar_lea.vmem %s0, 16
    %v275 = vld [vmem:[%s274] sm:$0xff]
    %276 = vmatpush.msra.mxu0 %v68
    %277 = vmatpush.msra.mxu0 %v66
    %278 = vmatpush.msra.mxu0 %v64
    %279 = vmatpush.msra.mxu0 %v62
    %280 = vmatpush.msra.mxu0 %v60
    %281 = vmatpush.msra.mxu0 %v58
    %282 = vmatpush.msra.mxu0 %v56
    %283 = vmatpush.msra.mxu0 %v54
    %284 = vmatpush.msra.mxu0 %v52
    %285 = vmatpush.msra.mxu0 %v50
    %286 = vmatpush.msra.mxu0 %v48
    %287 = vmatpush.msra.mxu0 %v46
    %288 = vmatpush.msra.mxu0 %v44
    %289 = vmatpush.msra.mxu0 %v42
    %290 = vmatpush.msra.mxu0 %v40
    %291 = vmatpush.msra.mxu0 %v38
    %292 = vmatmul.f32.gmra.mxu0 %v260
    %v293 = vpop.f32.mrf.mxu0
    %v294 = vadd.f32 0.0, %v293
    %295 = vdwg.mxu0
    %296 = vmatpush.msra.mxu0 %v69
    %297 = vmatpush.msra.mxu0 %v67
    %298 = vmatpush.msra.mxu0 %v65
    %299 = vmatpush.msra.mxu0 %v63
    %300 = vmatpush.msra.mxu0 %v61
    %301 = vmatpush.msra.mxu0 %v59
    %302 = vmatpush.msra.mxu0 %v57
    %303 = vmatpush.msra.mxu0 %v55
    %304 = vmatpush.msra.mxu0 %v53
    %305 = vmatpush.msra.mxu0 %v51
    %306 = vmatpush.msra.mxu0 %v49
    %307 = vmatpush.msra.mxu0 %v47
    %308 = vmatpush.msra.mxu0 %v45
    %309 = vmatpush.msra.mxu0 %v43
    %310 = vmatpush.msra.mxu0 %v41
    %311 = vmatpush.msra.mxu0 %v39
    %312 = vmatmul.f32.gmra.mxu0 %v260
    %v313 = vpop.f32.mrf.mxu0
    %v314 = vadd.f32 0.0, %v313
    %315 = vdwg.mxu0
    %v317 = vsel %vm118, %v275, 0
    %319 = vmatpush.msra.mxu0 0.0
    %320 = vmatpush.msra.mxu0 0.0
    %321 = vmatpush.msra.mxu0 0.0
    %322 = vmatpush.msra.mxu0 0.0
    %323 = vmatpush.msra.mxu0 0.0
    %324 = vmatpush.msra.mxu0 0.0
    %325 = vmatpush.msra.mxu0 0.0
    %326 = vmatpush.msra.mxu0 0.0
    %327 = vmatpush.msra.mxu0 0.0
    %328 = vmatpush.msra.mxu0 0.0
    %329 = vmatpush.msra.mxu0 0.0
    %330 = vmatpush.msra.mxu0 0.0
    %331 = vmatpush.msra.mxu0 %v36
    %332 = vmatpush.msra.mxu0 %v34
    %333 = vmatpush.msra.mxu0 %v32
    %334 = vmatpush.msra.mxu0 %v30
    %335 = vmatmul.f32.gmra.mxu0 %v317
    %v336 = vpop.f32.mrf.mxu0
    %v337 = vadd.f32 %v294, %v336
    %338 = vdwg.mxu0
    %339 = vmatpush.msra.mxu0 0.0
    %340 = vmatpush.msra.mxu0 0.0
    %341 = vmatpush.msra.mxu0 0.0
    %342 = vmatpush.msra.mxu0 0.0
    %343 = vmatpush.msra.mxu0 0.0
    %344 = vmatpush.msra.mxu0 0.0
    %345 = vmatpush.msra.mxu0 0.0
    %346 = vmatpush.msra.mxu0 0.0
    %347 = vmatpush.msra.mxu0 0.0
    %348 = vmatpush.msra.mxu0 0.0
    %349 = vmatpush.msra.mxu0 0.0
    %350 = vmatpush.msra.mxu0 0.0
    %351 = vmatpush.msra.mxu0 %v37
    %352 = vmatpush.msra.mxu0 %v35
    %353 = vmatpush.msra.mxu0 %v33
    %354 = vmatpush.msra.mxu0 %v31
    %355 = vmatmul.f32.gmra.mxu0 %v317
    %v356 = vpop.f32.mrf.mxu0
    %v357 = vadd.f32 %v314, %v356
    %358 = vdwg.mxu0
    %v359 = vadd.f32 %v337, %v72
    %v360 = vadd.f32 %v357, %v73
    %361 = vmax.xlane.f32.xlu0 %v360
    %v362 = vpop.xlane.xlu0 %361
    %v363 = vsub.f32 %v360, %v362
    %v364 = vmul.f32 %v363, 1.442695
    %v365 = vpow.pop %v364
    %366 = vadd.xlane.f32.xlu0 %v365
    %v367 = vpop.xlane.xlu0 %366
    %v368 = vlog2.pop %v367
    %v369 = vmul.f32 %v368, 0.6931472
    %v370 = vsub.f32 %v363, %v369
    %s371 = scalar_lea.vmem [#allocation3], 16
    %372 = vst [vmem:[%s371] sm:$0xff] %v370
    %s373 = scalar_lea.vmem %s0, 24
    %v374 = vld [vmem:[%s373] sm:$0xff]
    %375 = vmatpush.msra.mxu0 %v68
    %376 = vmatpush.msra.mxu0 %v66
    %377 = vmatpush.msra.mxu0 %v64
    %378 = vmatpush.msra.mxu0 %v62
    %379 = vmatpush.msra.mxu0 %v60
    %380 = vmatpush.msra.mxu0 %v58
    %381 = vmatpush.msra.mxu0 %v56
    %382 = vmatpush.msra.mxu0 %v54
    %383 = vmatpush.msra.mxu0 %v52
    %384 = vmatpush.msra.mxu0 %v50
    %385 = vmatpush.msra.mxu0 %v48
    %386 = vmatpush.msra.mxu0 %v46
    %387 = vmatpush.msra.mxu0 %v44
    %388 = vmatpush.msra.mxu0 %v42
    %389 = vmatpush.msra.mxu0 %v40
    %390 = vmatpush.msra.mxu0 %v38
    %391 = vmatmul.f32.gmra.mxu0 %v359
    %v392 = vpop.f32.mrf.mxu0
    %v393 = vadd.f32 0.0, %v392
    %394 = vdwg.mxu0
    %395 = vmatpush.msra.mxu0 %v69
    %396 = vmatpush.msra.mxu0 %v67
    %397 = vmatpush.msra.mxu0 %v65
    %398 = vmatpush.msra.mxu0 %v63
    %399 = vmatpush.msra.mxu0 %v61
    %400 = vmatpush.msra.mxu0 %v59
    %401 = vmatpush.msra.mxu0 %v57
    %402 = vmatpush.msra.mxu0 %v55
    %403 = vmatpush.msra.mxu0 %v53
    %404 = vmatpush.msra.mxu0 %v51
    %405 = vmatpush.msra.mxu0 %v49
    %406 = vmatpush.msra.mxu0 %v47
    %407 = vmatpush.msra.mxu0 %v45
    %408 = vmatpush.msra.mxu0 %v43
    %409 = vmatpush.msra.mxu0 %v41
    %410 = vmatpush.msra.mxu0 %v39
    %411 = vmatmul.f32.gmra.mxu0 %v359
    %v412 = vpop.f32.mrf.mxu0
    %v413 = vadd.f32 0.0, %v412
    %414 = vdwg.mxu0
    %v416 = vsel %vm118, %v374, 0
    %418 = vmatpush.msra.mxu0 0.0
    %419 = vmatpush.msra.mxu0 0.0
    %420 = vmatpush.msra.mxu0 0.0
    %421 = vmatpush.msra.mxu0 0.0
    %422 = vmatpush.msra.mxu0 0.0
    %423 = vmatpush.msra.mxu0 0.0
    %424 = vmatpush.msra.mxu0 0.0
    %425 = vmatpush.msra.mxu0 0.0
    %426 = vmatpush.msra.mxu0 0.0
    %427 = vmatpush.msra.mxu0 0.0
    %428 = vmatpush.msra.mxu0 0.0
    %429 = vmatpush.msra.mxu0 0.0
    %430 = vmatpush.msra.mxu0 %v36
    %431 = vmatpush.msra.mxu0 %v34
    %432 = vmatpush.msra.mxu0 %v32
    %433 = vmatpush.msra.mxu0 %v30
    %434 = vmatmul.f32.gmra.mxu0 %v416
    %v435 = vpop.f32.mrf.mxu0
    %v436 = vadd.f32 %v393, %v435
    %437 = vdwg.mxu0
    %438 = vmatpush.msra.mxu0 0.0
    %439 = vmatpush.msra.mxu0 0.0
    %440 = vmatpush.msra.mxu0 0.0
    %441 = vmatpush.msra.mxu0 0.0
    %442 = vmatpush.msra.mxu0 0.0
    %443 = vmatpush.msra.mxu0 0.0
    %444 = vmatpush.msra.mxu0 0.0
    %445 = vmatpush.msra.mxu0 0.0
    %446 = vmatpush.msra.mxu0 0.0
    %447 = vmatpush.msra.mxu0 0.0
    %448 = vmatpush.msra.mxu0 0.0
    %449 = vmatpush.msra.mxu0 0.0
    %450 = vmatpush.msra.mxu0 %v37
    %451 = vmatpush.msra.mxu0 %v35
    %452 = vmatpush.msra.mxu0 %v33
    %453 = vmatpush.msra.mxu0 %v31
    %454 = vmatmul.f32.gmra.mxu0 %v416
    %v455 = vpop.f32.mrf.mxu0
    %v456 = vadd.f32 %v413, %v455
    %457 = vdwg.mxu0
    %v458 = vadd.f32 %v436, %v72
    %v459 = vadd.f32 %v456, %v73
    %460 = vmax.xlane.f32.xlu0 %v459
    %v461 = vpop.xlane.xlu0 %460
    %v462 = vsub.f32 %v459, %v461
    %v463 = vmul.f32 %v462, 1.442695
    %v464 = vpow.pop %v463
    %465 = vadd.xlane.f32.xlu0 %v464
    %v466 = vpop.xlane.xlu0 %465
    %v467 = vlog2.pop %v466
    %v468 = vmul.f32 %v467, 0.6931472
    %v469 = vsub.f32 %v462, %v468
    %s470 = scalar_lea.vmem [#allocation3], 24
    %471 = vst [vmem:[%s470] sm:$0xff] %v469
    %s472 = scalar_lea.vmem %s0, 32
    %v473 = vld [vmem:[%s472] sm:$0xff]
    %474 = vmatpush.msra.mxu0 %v68
    %475 = vmatpush.msra.mxu0 %v66
    %476 = vmatpush.msra.mxu0 %v64
    %477 = vmatpush.msra.mxu0 %v62
    %478 = vmatpush.msra.mxu0 %v60
    %479 = vmatpush.msra.mxu0 %v58
    %480 = vmatpush.msra.mxu0 %v56
    %481 = vmatpush.msra.mxu0 %v54
    %482 = vmatpush.msra.mxu0 %v52
    %483 = vmatpush.msra.mxu0 %v50
    %484 = vmatpush.msra.mxu0 %v48
    %485 = vmatpush.msra.mxu0 %v46
    %486 = vmatpush.msra.mxu0 %v44
    %487 = vmatpush.msra.mxu0 %v42
    %488 = vmatpush.msra.mxu0 %v40
    %489 = vmatpush.msra.mxu0 %v38
    %490 = vmatmul.f32.gmra.mxu0 %v458
    %v491 = vpop.f32.mrf.mxu0
    %v492 = vadd.f32 0.0, %v491
    %493 = vdwg.mxu0
    %494 = vmatpush.msra.mxu0 %v69
    %495 = vmatpush.msra.mxu0 %v67
    %496 = vmatpush.msra.mxu0 %v65
    %497 = vmatpush.msra.mxu0 %v63
    %498 = vmatpush.msra.mxu0 %v61
    %499 = vmatpush.msra.mxu0 %v59
    %500 = vmatpush.msra.mxu0 %v57
    %501 = vmatpush.msra.mxu0 %v55
    %502 = vmatpush.msra.mxu0 %v53
    %503 = vmatpush.msra.mxu0 %v51
    %504 = vmatpush.msra.mxu0 %v49
    %505 = vmatpush.msra.mxu0 %v47
    %506 = vmatpush.msra.mxu0 %v45
    %507 = vmatpush.msra.mxu0 %v43
    %508 = vmatpush.msra.mxu0 %v41
    %509 = vmatpush.msra.mxu0 %v39
    %510 = vmatmul.f32.gmra.mxu0 %v458
    %v511 = vpop.f32.mrf.mxu0
    %v512 = vadd.f32 0.0, %v511
    %513 = vdwg.mxu0
    %v515 = vsel %vm118, %v473, 0
    %517 = vmatpush.msra.mxu0 0.0
    %518 = vmatpush.msra.mxu0 0.0
    %519 = vmatpush.msra.mxu0 0.0
    %520 = vmatpush.msra.mxu0 0.0
    %521 = vmatpush.msra.mxu0 0.0
    %522 = vmatpush.msra.mxu0 0.0
    %523 = vmatpush.msra.mxu0 0.0
    %524 = vmatpush.msra.mxu0 0.0
    %525 = vmatpush.msra.mxu0 0.0
    %526 = vmatpush.msra.mxu0 0.0
    %527 = vmatpush.msra.mxu0 0.0
    %528 = vmatpush.msra.mxu0 0.0
    %529 = vmatpush.msra.mxu0 %v36
    %530 = vmatpush.msra.mxu0 %v34
    %531 = vmatpush.msra.mxu0 %v32
    %532 = vmatpush.msra.mxu0 %v30
    %533 = vmatmul.f32.gmra.mxu0 %v515
    %v534 = vpop.f32.mrf.mxu0
    %v535 = vadd.f32 %v492, %v534
    %536 = vdwg.mxu0
    %537 = vmatpush.msra.mxu0 0.0
    %538 = vmatpush.msra.mxu0 0.0
    %539 = vmatpush.msra.mxu0 0.0
    %540 = vmatpush.msra.mxu0 0.0
    %541 = vmatpush.msra.mxu0 0.0
    %542 = vmatpush.msra.mxu0 0.0
    %543 = vmatpush.msra.mxu0 0.0
    %544 = vmatpush.msra.mxu0 0.0
    %545 = vmatpush.msra.mxu0 0.0
    %546 = vmatpush.msra.mxu0 0.0
    %547 = vmatpush.msra.mxu0 0.0
    %548 = vmatpush.msra.mxu0 0.0
    %549 = vmatpush.msra.mxu0 %v37
    %550 = vmatpush.msra.mxu0 %v35
    %551 = vmatpush.msra.mxu0 %v33
    %552 = vmatpush.msra.mxu0 %v31
    %553 = vmatmul.f32.gmra.mxu0 %v515
    %v554 = vpop.f32.mrf.mxu0
    %v555 = vadd.f32 %v512, %v554
    %556 = vdwg.mxu0
    %v557 = vadd.f32 %v535, %v72
    %v558 = vadd.f32 %v555, %v73
    %559 = vmax.xlane.f32.xlu0 %v558
    %v560 = vpop.xlane.xlu0 %559
    %v561 = vsub.f32 %v558, %v560
    %v562 = vmul.f32 %v561, 1.442695
    %v563 = vpow.pop %v562
    %564 = vadd.xlane.f32.xlu0 %v563
    %v565 = vpop.xlane.xlu0 %564
    %v566 = vlog2.pop %v565
    %v567 = vmul.f32 %v566, 0.6931472
    %v568 = vsub.f32 %v561, %v567
    %s569 = scalar_lea.vmem [#allocation3], 32
    %570 = vst [vmem:[%s569] sm:$0xff] %v568
    %s571 = scalar_lea.vmem %s0, 40
    %v572 = vld [vmem:[%s571] sm:$0xff]
    %573 = vmatpush.msra.mxu0 %v68
    %574 = vmatpush.msra.mxu0 %v66
    %575 = vmatpush.msra.mxu0 %v64
    %576 = vmatpush.msra.mxu0 %v62
    %577 = vmatpush.msra.mxu0 %v60
    %578 = vmatpush.msra.mxu0 %v58
    %579 = vmatpush.msra.mxu0 %v56
    %580 = vmatpush.msra.mxu0 %v54
    %581 = vmatpush.msra.mxu0 %v52
    %582 = vmatpush.msra.mxu0 %v50
    %583 = vmatpush.msra.mxu0 %v48
    %584 = vmatpush.msra.mxu0 %v46
    %585 = vmatpush.msra.mxu0 %v44
    %586 = vmatpush.msra.mxu0 %v42
    %587 = vmatpush.msra.mxu0 %v40
    %588 = vmatpush.msra.mxu0 %v38
    %589 = vmatmul.f32.gmra.mxu0 %v557
    %v590 = vpop.f32.mrf.mxu0
    %v591 = vadd.f32 0.0, %v590
    %592 = vdwg.mxu0
    %593 = vmatpush.msra.mxu0 %v69
    %594 = vmatpush.msra.mxu0 %v67
    %595 = vmatpush.msra.mxu0 %v65
    %596 = vmatpush.msra.mxu0 %v63
    %597 = vmatpush.msra.mxu0 %v61
    %598 = vmatpush.msra.mxu0 %v59
    %599 = vmatpush.msra.mxu0 %v57
    %600 = vmatpush.msra.mxu0 %v55
    %601 = vmatpush.msra.mxu0 %v53
    %602 = vmatpush.msra.mxu0 %v51
    %603 = vmatpush.msra.mxu0 %v49
    %604 = vmatpush.msra.mxu0 %v47
    %605 = vmatpush.msra.mxu0 %v45
    %606 = vmatpush.msra.mxu0 %v43
    %607 = vmatpush.msra.mxu0 %v41
    %608 = vmatpush.msra.mxu0 %v39
    %609 = vmatmul.f32.gmra.mxu0 %v557
    %v610 = vpop.f32.mrf.mxu0
    %v611 = vadd.f32 0.0, %v610
    %612 = vdwg.mxu0
    %v614 = vsel %vm118, %v572, 0
    %616 = vmatpush.msra.mxu0 0.0
    %617 = vmatpush.msra.mxu0 0.0
    %618 = vmatpush.msra.mxu0 0.0
    %619 = vmatpush.msra.mxu0 0.0
    %620 = vmatpush.msra.mxu0 0.0
    %621 = vmatpush.msra.mxu0 0.0
    %622 = vmatpush.msra.mxu0 0.0
    %623 = vmatpush.msra.mxu0 0.0
    %624 = vmatpush.msra.mxu0 0.0
    %625 = vmatpush.msra.mxu0 0.0
    %626 = vmatpush.msra.mxu0 0.0
    %627 = vmatpush.msra.mxu0 0.0
    %628 = vmatpush.msra.mxu0 %v36
    %629 = vmatpush.msra.mxu0 %v34
    %630 = vmatpush.msra.mxu0 %v32
    %631 = vmatpush.msra.mxu0 %v30
    %632 = vmatmul.f32.gmra.mxu0 %v614
    %v633 = vpop.f32.mrf.mxu0
    %v634 = vadd.f32 %v591, %v633
    %635 = vdwg.mxu0
    %636 = vmatpush.msra.mxu0 0.0
    %637 = vmatpush.msra.mxu0 0.0
    %638 = vmatpush.msra.mxu0 0.0
    %639 = vmatpush.msra.mxu0 0.0
    %640 = vmatpush.msra.mxu0 0.0
    %641 = vmatpush.msra.mxu0 0.0
    %642 = vmatpush.msra.mxu0 0.0
    %643 = vmatpush.msra.mxu0 0.0
    %644 = vmatpush.msra.mxu0 0.0
    %645 = vmatpush.msra.mxu0 0.0
    %646 = vmatpush.msra.mxu0 0.0
    %647 = vmatpush.msra.mxu0 0.0
    %648 = vmatpush.msra.mxu0 %v37
    %649 = vmatpush.msra.mxu0 %v35
    %650 = vmatpush.msra.mxu0 %v33
    %651 = vmatpush.msra.mxu0 %v31
    %652 = vmatmul.f32.gmra.mxu0 %v614
    %v653 = vpop.f32.mrf.mxu0
    %v654 = vadd.f32 %v611, %v653
    %655 = vdwg.mxu0
    %v656 = vadd.f32 %v634, %v72
    %v657 = vadd.f32 %v654, %v73
    %658 = vmax.xlane.f32.xlu0 %v657
    %v659 = vpop.xlane.xlu0 %658
    %v660 = vsub.f32 %v657, %v659
    %v661 = vmul.f32 %v660, 1.442695
    %v662 = vpow.pop %v661
    %663 = vadd.xlane.f32.xlu0 %v662
    %v664 = vpop.xlane.xlu0 %663
    %v665 = vlog2.pop %v664
    %v666 = vmul.f32 %v665, 0.6931472
    %v667 = vsub.f32 %v660, %v666
    %s668 = scalar_lea.vmem [#allocation3], 40
    %669 = vst [vmem:[%s668] sm:$0xff] %v667
    %s670 = scalar_lea.vmem %s0, 48
    %v671 = vld [vmem:[%s670] sm:$0xff]
    %672 = vmatpush.msra.mxu0 %v68
    %673 = vmatpush.msra.mxu0 %v66
    %674 = vmatpush.msra.mxu0 %v64
    %675 = vmatpush.msra.mxu0 %v62
    %676 = vmatpush.msra.mxu0 %v60
    %677 = vmatpush.msra.mxu0 %v58
    %678 = vmatpush.msra.mxu0 %v56
    %679 = vmatpush.msra.mxu0 %v54
    %680 = vmatpush.msra.mxu0 %v52
    %681 = vmatpush.msra.mxu0 %v50
    %682 = vmatpush.msra.mxu0 %v48
    %683 = vmatpush.msra.mxu0 %v46
    %684 = vmatpush.msra.mxu0 %v44
    %685 = vmatpush.msra.mxu0 %v42
    %686 = vmatpush.msra.mxu0 %v40
    %687 = vmatpush.msra.mxu0 %v38
    %688 = vmatmul.f32.gmra.mxu0 %v656
    %v689 = vpop.f32.mrf.mxu0
    %v690 = vadd.f32 0.0, %v689
    %691 = vdwg.mxu0
    %692 = vmatpush.msra.mxu0 %v69
    %693 = vmatpush.msra.mxu0 %v67
    %694 = vmatpush.msra.mxu0 %v65
    %695 = vmatpush.msra.mxu0 %v63
    %696 = vmatpush.msra.mxu0 %v61
    %697 = vmatpush.msra.mxu0 %v59
    %698 = vmatpush.msra.mxu0 %v57
    %699 = vmatpush.msra.mxu0 %v55
    %700 = vmatpush.msra.mxu0 %v53
    %701 = vmatpush.msra.mxu0 %v51
    %702 = vmatpush.msra.mxu0 %v49
    %703 = vmatpush.msra.mxu0 %v47
    %704 = vmatpush.msra.mxu0 %v45
    %705 = vmatpush.msra.mxu0 %v43
    %706 = vmatpush.msra.mxu0 %v41
    %707 = vmatpush.msra.mxu0 %v39
    %708 = vmatmul.f32.gmra.mxu0 %v656
    %v709 = vpop.f32.mrf.mxu0
    %v710 = vadd.f32 0.0, %v709
    %711 = vdwg.mxu0
    %v713 = vsel %vm118, %v671, 0
    %715 = vmatpush.msra.mxu0 0.0
    %716 = vmatpush.msra.mxu0 0.0
    %717 = vmatpush.msra.mxu0 0.0
    %718 = vmatpush.msra.mxu0 0.0
    %719 = vmatpush.msra.mxu0 0.0
    %720 = vmatpush.msra.mxu0 0.0
    %721 = vmatpush.msra.mxu0 0.0
    %722 = vmatpush.msra.mxu0 0.0
    %723 = vmatpush.msra.mxu0 0.0
    %724 = vmatpush.msra.mxu0 0.0
    %725 = vmatpush.msra.mxu0 0.0
    %726 = vmatpush.msra.mxu0 0.0
    %727 = vmatpush.msra.mxu0 %v36
    %728 = vmatpush.msra.mxu0 %v34
    %729 = vmatpush.msra.mxu0 %v32
    %730 = vmatpush.msra.mxu0 %v30
    %731 = vmatmul.f32.gmra.mxu0 %v713
    %v732 = vpop.f32.mrf.mxu0
    %v733 = vadd.f32 %v690, %v732
    %734 = vdwg.mxu0
    %735 = vmatpush.msra.mxu0 0.0
    %736 = vmatpush.msra.mxu0 0.0
    %737 = vmatpush.msra.mxu0 0.0
    %738 = vmatpush.msra.mxu0 0.0
    %739 = vmatpush.msra.mxu0 0.0
    %740 = vmatpush.msra.mxu0 0.0
    %741 = vmatpush.msra.mxu0 0.0
    %742 = vmatpush.msra.mxu0 0.0
    %743 = vmatpush.msra.mxu0 0.0
    %744 = vmatpush.msra.mxu0 0.0
    %745 = vmatpush.msra.mxu0 0.0
    %746 = vmatpush.msra.mxu0 0.0
    %747 = vmatpush.msra.mxu0 %v37
    %748 = vmatpush.msra.mxu0 %v35
    %749 = vmatpush.msra.mxu0 %v33
    %750 = vmatpush.msra.mxu0 %v31
    %751 = vmatmul.f32.gmra.mxu0 %v713
    %v752 = vpop.f32.mrf.mxu0
    %v753 = vadd.f32 %v710, %v752
    %754 = vdwg.mxu0
    %v755 = vadd.f32 %v733, %v72
    %v756 = vadd.f32 %v753, %v73
    %757 = vmax.xlane.f32.xlu0 %v756
    %v758 = vpop.xlane.xlu0 %757
    %v759 = vsub.f32 %v756, %v758
    %v760 = vmul.f32 %v759, 1.442695
    %v761 = vpow.pop %v760
    %762 = vadd.xlane.f32.xlu0 %v761
    %v763 = vpop.xlane.xlu0 %762
    %v764 = vlog2.pop %v763
    %v765 = vmul.f32 %v764, 0.6931472
    %v766 = vsub.f32 %v759, %v765
    %s767 = scalar_lea.vmem [#allocation3], 48
    %768 = vst [vmem:[%s767] sm:$0xff] %v766
    %s769 = scalar_lea.vmem %s0, 56
    %v770 = vld [vmem:[%s769] sm:$0xff]
    %771 = vmatpush.msra.mxu0 %v68
    %772 = vmatpush.msra.mxu0 %v66
    %773 = vmatpush.msra.mxu0 %v64
    %774 = vmatpush.msra.mxu0 %v62
    %775 = vmatpush.msra.mxu0 %v60
    %776 = vmatpush.msra.mxu0 %v58
    %777 = vmatpush.msra.mxu0 %v56
    %778 = vmatpush.msra.mxu0 %v54
    %779 = vmatpush.msra.mxu0 %v52
    %780 = vmatpush.msra.mxu0 %v50
    %781 = vmatpush.msra.mxu0 %v48
    %782 = vmatpush.msra.mxu0 %v46
    %783 = vmatpush.msra.mxu0 %v44
    %784 = vmatpush.msra.mxu0 %v42
    %785 = vmatpush.msra.mxu0 %v40
    %786 = vmatpush.msra.mxu0 %v38
    %787 = vmatmul.f32.gmra.mxu0 %v755
    %v788 = vpop.f32.mrf.mxu0
    %v789 = vadd.f32 0.0, %v788
    %790 = vdwg.mxu0
    %791 = vmatpush.msra.mxu0 %v69
    %792 = vmatpush.msra.mxu0 %v67
    %793 = vmatpush.msra.mxu0 %v65
    %794 = vmatpush.msra.mxu0 %v63
    %795 = vmatpush.msra.mxu0 %v61
    %796 = vmatpush.msra.mxu0 %v59
    %797 = vmatpush.msra.mxu0 %v57
    %798 = vmatpush.msra.mxu0 %v55
    %799 = vmatpush.msra.mxu0 %v53
    %800 = vmatpush.msra.mxu0 %v51
    %801 = vmatpush.msra.mxu0 %v49
    %802 = vmatpush.msra.mxu0 %v47
    %803 = vmatpush.msra.mxu0 %v45
    %804 = vmatpush.msra.mxu0 %v43
    %805 = vmatpush.msra.mxu0 %v41
    %806 = vmatpush.msra.mxu0 %v39
    %807 = vmatmul.f32.gmra.mxu0 %v755
    %v808 = vpop.f32.mrf.mxu0
    %v809 = vadd.f32 0.0, %v808
    %810 = vdwg.mxu0
    %v812 = vsel %vm118, %v770, 0
    %814 = vmatpush.msra.mxu0 0.0
    %815 = vmatpush.msra.mxu0 0.0
    %816 = vmatpush.msra.mxu0 0.0
    %817 = vmatpush.msra.mxu0 0.0
    %818 = vmatpush.msra.mxu0 0.0
    %819 = vmatpush.msra.mxu0 0.0
    %820 = vmatpush.msra.mxu0 0.0
    %821 = vmatpush.msra.mxu0 0.0
    %822 = vmatpush.msra.mxu0 0.0
    %823 = vmatpush.msra.mxu0 0.0
    %824 = vmatpush.msra.mxu0 0.0
    %825 = vmatpush.msra.mxu0 0.0
    %826 = vmatpush.msra.mxu0 %v36
    %827 = vmatpush.msra.mxu0 %v34
    %828 = vmatpush.msra.mxu0 %v32
    %829 = vmatpush.msra.mxu0 %v30
    %830 = vmatmul.f32.gmra.mxu0 %v812
    %v831 = vpop.f32.mrf.mxu0
    %v832 = vadd.f32 %v789, %v831
    %833 = vdwg.mxu0
    %834 = vmatpush.msra.mxu0 0.0
    %835 = vmatpush.msra.mxu0 0.0
    %836 = vmatpush.msra.mxu0 0.0
    %837 = vmatpush.msra.mxu0 0.0
    %838 = vmatpush.msra.mxu0 0.0
    %839 = vmatpush.msra.mxu0 0.0
    %840 = vmatpush.msra.mxu0 0.0
    %841 = vmatpush.msra.mxu0 0.0
    %842 = vmatpush.msra.mxu0 0.0
    %843 = vmatpush.msra.mxu0 0.0
    %844 = vmatpush.msra.mxu0 0.0
    %845 = vmatpush.msra.mxu0 0.0
    %846 = vmatpush.msra.mxu0 %v37
    %847 = vmatpush.msra.mxu0 %v35
    %848 = vmatpush.msra.mxu0 %v33
    %849 = vmatpush.msra.mxu0 %v31
    %850 = vmatmul.f32.gmra.mxu0 %v812
    %v851 = vpop.f32.mrf.mxu0
    %v852 = vadd.f32 %v809, %v851
    %853 = vdwg.mxu0
    %v854 = vadd.f32 %v832, %v72
    %v855 = vadd.f32 %v852, %v73
    %856 = vmax.xlane.f32.xlu0 %v855
    %v857 = vpop.xlane.xlu0 %856
    %v858 = vsub.f32 %v855, %v857
    %v859 = vmul.f32 %v858, 1.442695
    %v860 = vpow.pop %v859
    %861 = vadd.xlane.f32.xlu0 %v860
    %v862 = vpop.xlane.xlu0 %861
    %v863 = vlog2.pop %v862
    %v864 = vmul.f32 %v863, 0.6931472
    %v865 = vsub.f32 %v858, %v864
    %s866 = scalar_lea.vmem [#allocation3], 56
    %867 = vst [vmem:[%s866] sm:$0xff] %v865
    %s868 = scalar_lea.vmem %s0, 64
    %v869 = vld [vmem:[%s868] sm:$0xff]
    %870 = vmatpush.msra.mxu0 %v68
    %871 = vmatpush.msra.mxu0 %v66
    %872 = vmatpush.msra.mxu0 %v64
    %873 = vmatpush.msra.mxu0 %v62
    %874 = vmatpush.msra.mxu0 %v60
    %875 = vmatpush.msra.mxu0 %v58
    %876 = vmatpush.msra.mxu0 %v56
    %877 = vmatpush.msra.mxu0 %v54
    %878 = vmatpush.msra.mxu0 %v52
    %879 = vmatpush.msra.mxu0 %v50
    %880 = vmatpush.msra.mxu0 %v48
    %881 = vmatpush.msra.mxu0 %v46
    %882 = vmatpush.msra.mxu0 %v44
    %883 = vmatpush.msra.mxu0 %v42
    %884 = vmatpush.msra.mxu0 %v40
    %885 = vmatpush.msra.mxu0 %v38
    %886 = vmatmul.f32.gmra.mxu0 %v854
    %v887 = vpop.f32.mrf.mxu0
    %v888 = vadd.f32 0.0, %v887
    %889 = vdwg.mxu0
    %890 = vmatpush.msra.mxu0 %v69
    %891 = vmatpush.msra.mxu0 %v67
    %892 = vmatpush.msra.mxu0 %v65
    %893 = vmatpush.msra.mxu0 %v63
    %894 = vmatpush.msra.mxu0 %v61
    %895 = vmatpush.msra.mxu0 %v59
    %896 = vmatpush.msra.mxu0 %v57
    %897 = vmatpush.msra.mxu0 %v55
    %898 = vmatpush.msra.mxu0 %v53
    %899 = vmatpush.msra.mxu0 %v51
    %900 = vmatpush.msra.mxu0 %v49
    %901 = vmatpush.msra.mxu0 %v47
    %902 = vmatpush.msra.mxu0 %v45
    %903 = vmatpush.msra.mxu0 %v43
    %904 = vmatpush.msra.mxu0 %v41
    %905 = vmatpush.msra.mxu0 %v39
    %906 = vmatmul.f32.gmra.mxu0 %v854
    %v907 = vpop.f32.mrf.mxu0
    %v908 = vadd.f32 0.0, %v907
    %909 = vdwg.mxu0
    %v911 = vsel %vm118, %v869, 0
    %913 = vmatpush.msra.mxu0 0.0
    %914 = vmatpush.msra.mxu0 0.0
    %915 = vmatpush.msra.mxu0 0.0
    %916 = vmatpush.msra.mxu0 0.0
    %917 = vmatpush.msra.mxu0 0.0
    %918 = vmatpush.msra.mxu0 0.0
    %919 = vmatpush.msra.mxu0 0.0
    %920 = vmatpush.msra.mxu0 0.0
    %921 = vmatpush.msra.mxu0 0.0
    %922 = vmatpush.msra.mxu0 0.0
    %923 = vmatpush.msra.mxu0 0.0
    %924 = vmatpush.msra.mxu0 0.0
    %925 = vmatpush.msra.mxu0 %v36
    %926 = vmatpush.msra.mxu0 %v34
    %927 = vmatpush.msra.mxu0 %v32
    %928 = vmatpush.msra.mxu0 %v30
    %929 = vmatmul.f32.gmra.mxu0 %v911
    %v930 = vpop.f32.mrf.mxu0
    %v931 = vadd.f32 %v888, %v930
    %932 = vdwg.mxu0
    %933 = vmatpush.msra.mxu0 0.0
    %934 = vmatpush.msra.mxu0 0.0
    %935 = vmatpush.msra.mxu0 0.0
    %936 = vmatpush.msra.mxu0 0.0
    %937 = vmatpush.msra.mxu0 0.0
    %938 = vmatpush.msra.mxu0 0.0
    %939 = vmatpush.msra.mxu0 0.0
    %940 = vmatpush.msra.mxu0 0.0
    %941 = vmatpush.msra.mxu0 0.0
    %942 = vmatpush.msra.mxu0 0.0
    %943 = vmatpush.msra.mxu0 0.0
    %944 = vmatpush.msra.mxu0 0.0
    %945 = vmatpush.msra.mxu0 %v37
    %946 = vmatpush.msra.mxu0 %v35
    %947 = vmatpush.msra.mxu0 %v33
    %948 = vmatpush.msra.mxu0 %v31
    %949 = vmatmul.f32.gmra.mxu0 %v911
    %v950 = vpop.f32.mrf.mxu0
    %v951 = vadd.f32 %v908, %v950
    %952 = vdwg.mxu0
    %v953 = vadd.f32 %v931, %v72
    %v954 = vadd.f32 %v951, %v73
    %955 = vmax.xlane.f32.xlu0 %v954
    %v956 = vpop.xlane.xlu0 %955
    %v957 = vsub.f32 %v954, %v956
    %v958 = vmul.f32 %v957, 1.442695
    %v959 = vpow.pop %v958
    %960 = vadd.xlane.f32.xlu0 %v959
    %v961 = vpop.xlane.xlu0 %960
    %v962 = vlog2.pop %v961
    %v963 = vmul.f32 %v962, 0.6931472
    %v964 = vsub.f32 %v957, %v963
    %s965 = scalar_lea.vmem [#allocation3], 64
    %966 = vst [vmem:[%s965] sm:$0xff] %v964
    %s967 = scalar_lea.vmem %s0, 72
    %v968 = vld [vmem:[%s967] sm:$0xff]
    %969 = vmatpush.msra.mxu0 %v68
    %970 = vmatpush.msra.mxu0 %v66
    %971 = vmatpush.msra.mxu0 %v64
    %972 = vmatpush.msra.mxu0 %v62
    %973 = vmatpush.msra.mxu0 %v60
    %974 = vmatpush.msra.mxu0 %v58
    %975 = vmatpush.msra.mxu0 %v56
    %976 = vmatpush.msra.mxu0 %v54
    %977 = vmatpush.msra.mxu0 %v52
    %978 = vmatpush.msra.mxu0 %v50
    %979 = vmatpush.msra.mxu0 %v48
    %980 = vmatpush.msra.mxu0 %v46
    %981 = vmatpush.msra.mxu0 %v44
    %982 = vmatpush.msra.mxu0 %v42
    %983 = vmatpush.msra.mxu0 %v40
    %984 = vmatpush.msra.mxu0 %v38
    %985 = vmatmul.f32.gmra.mxu0 %v953
    %v986 = vpop.f32.mrf.mxu0
    %v987 = vadd.f32 0.0, %v986
    %988 = vdwg.mxu0
    %989 = vmatpush.msra.mxu0 %v69
    %990 = vmatpush.msra.mxu0 %v67
    %991 = vmatpush.msra.mxu0 %v65
    %992 = vmatpush.msra.mxu0 %v63
    %993 = vmatpush.msra.mxu0 %v61
    %994 = vmatpush.msra.mxu0 %v59
    %995 = vmatpush.msra.mxu0 %v57
    %996 = vmatpush.msra.mxu0 %v55
    %997 = vmatpush.msra.mxu0 %v53
    %998 = vmatpush.msra.mxu0 %v51
    %999 = vmatpush.msra.mxu0 %v49
    %1000 = vmatpush.msra.mxu0 %v47
    %1001 = vmatpush.msra.mxu0 %v45
    %1002 = vmatpush.msra.mxu0 %v43
    %1003 = vmatpush.msra.mxu0 %v41
    %1004 = vmatpush.msra.mxu0 %v39
    %1005 = vmatmul.f32.gmra.mxu0 %v953
    %v1006 = vpop.f32.mrf.mxu0
    %v1007 = vadd.f32 0.0, %v1006
    %1008 = vdwg.mxu0
    %v1010 = vsel %vm118, %v968, 0
    %1012 = vmatpush.msra.mxu0 0.0
    %1013 = vmatpush.msra.mxu0 0.0
    %1014 = vmatpush.msra.mxu0 0.0
    %1015 = vmatpush.msra.mxu0 0.0
    %1016 = vmatpush.msra.mxu0 0.0
    %1017 = vmatpush.msra.mxu0 0.0
    %1018 = vmatpush.msra.mxu0 0.0
    %1019 = vmatpush.msra.mxu0 0.0
    %1020 = vmatpush.msra.mxu0 0.0
    %1021 = vmatpush.msra.mxu0 0.0
    %1022 = vmatpush.msra.mxu0 0.0
    %1023 = vmatpush.msra.mxu0 0.0
    %1024 = vmatpush.msra.mxu0 %v36
    %1025 = vmatpush.msra.mxu0 %v34
    %1026 = vmatpush.msra.mxu0 %v32
    %1027 = vmatpush.msra.mxu0 %v30
    %1028 = vmatmul.f32.gmra.mxu0 %v1010
    %v1029 = vpop.f32.mrf.mxu0
    %v1030 = vadd.f32 %v987, %v1029
    %1031 = vdwg.mxu0
    %1032 = vmatpush.msra.mxu0 0.0
    %1033 = vmatpush.msra.mxu0 0.0
    %1034 = vmatpush.msra.mxu0 0.0
    %1035 = vmatpush.msra.mxu0 0.0
    %1036 = vmatpush.msra.mxu0 0.0
    %1037 = vmatpush.msra.mxu0 0.0
    %1038 = vmatpush.msra.mxu0 0.0
    %1039 = vmatpush.msra.mxu0 0.0
    %1040 = vmatpush.msra.mxu0 0.0
    %1041 = vmatpush.msra.mxu0 0.0
    %1042 = vmatpush.msra.mxu0 0.0
    %1043 = vmatpush.msra.mxu0 0.0
    %1044 = vmatpush.msra.mxu0 %v37
    %1045 = vmatpush.msra.mxu0 %v35
    %1046 = vmatpush.msra.mxu0 %v33
    %1047 = vmatpush.msra.mxu0 %v31
    %1048 = vmatmul.f32.gmra.mxu0 %v1010
    %v1049 = vpop.f32.mrf.mxu0
    %v1050 = vadd.f32 %v1007, %v1049
    %1051 = vdwg.mxu0
    %v1052 = vadd.f32 %v1030, %v72
    %v1053 = vadd.f32 %v1050, %v73
    %1054 = vmax.xlane.f32.xlu0 %v1053
    %v1055 = vpop.xlane.xlu0 %1054
    %v1056 = vsub.f32 %v1053, %v1055
    %v1057 = vmul.f32 %v1056, 1.442695
    %v1058 = vpow.pop %v1057
    %1059 = vadd.xlane.f32.xlu0 %v1058
    %v1060 = vpop.xlane.xlu0 %1059
    %v1061 = vlog2.pop %v1060
    %v1062 = vmul.f32 %v1061, 0.6931472
    %v1063 = vsub.f32 %v1056, %v1062
    %s1064 = scalar_lea.vmem [#allocation3], 72
    %1065 = vst [vmem:[%s1064] sm:$0xff] %v1063
    %s1066 = scalar_lea.vmem %s0, 80
    %v1067 = vld [vmem:[%s1066] sm:$0xff]
    %1068 = vmatpush.msra.mxu0 %v68
    %1069 = vmatpush.msra.mxu0 %v66
    %1070 = vmatpush.msra.mxu0 %v64
    %1071 = vmatpush.msra.mxu0 %v62
    %1072 = vmatpush.msra.mxu0 %v60
    %1073 = vmatpush.msra.mxu0 %v58
    %1074 = vmatpush.msra.mxu0 %v56
    %1075 = vmatpush.msra.mxu0 %v54
    %1076 = vmatpush.msra.mxu0 %v52
    %1077 = vmatpush.msra.mxu0 %v50
    %1078 = vmatpush.msra.mxu0 %v48
    %1079 = vmatpush.msra.mxu0 %v46
    %1080 = vmatpush.msra.mxu0 %v44
    %1081 = vmatpush.msra.mxu0 %v42
    %1082 = vmatpush.msra.mxu0 %v40
    %1083 = vmatpush.msra.mxu0 %v38
    %1084 = vmatmul.f32.gmra.mxu0 %v1052
    %v1085 = vpop.f32.mrf.mxu0
    %v1086 = vadd.f32 0.0, %v1085
    %1087 = vdwg.mxu0
    %1088 = vmatpush.msra.mxu0 %v69
    %1089 = vmatpush.msra.mxu0 %v67
    %1090 = vmatpush.msra.mxu0 %v65
    %1091 = vmatpush.msra.mxu0 %v63
    %1092 = vmatpush.msra.mxu0 %v61
    %1093 = vmatpush.msra.mxu0 %v59
    %1094 = vmatpush.msra.mxu0 %v57
    %1095 = vmatpush.msra.mxu0 %v55
    %1096 = vmatpush.msra.mxu0 %v53
    %1097 = vmatpush.msra.mxu0 %v51
    %1098 = vmatpush.msra.mxu0 %v49
    %1099 = vmatpush.msra.mxu0 %v47
    %1100 = vmatpush.msra.mxu0 %v45
    %1101 = vmatpush.msra.mxu0 %v43
    %1102 = vmatpush.msra.mxu0 %v41
    %1103 = vmatpush.msra.mxu0 %v39
    %1104 = vmatmul.f32.gmra.mxu0 %v1052
    %v1105 = vpop.f32.mrf.mxu0
    %v1106 = vadd.f32 0.0, %v1105
    %1107 = vdwg.mxu0
    %v1109 = vsel %vm118, %v1067, 0
    %1111 = vmatpush.msra.mxu0 0.0
    %1112 = vmatpush.msra.mxu0 0.0
    %1113 = vmatpush.msra.mxu0 0.0
    %1114 = vmatpush.msra.mxu0 0.0
    %1115 = vmatpush.msra.mxu0 0.0
    %1116 = vmatpush.msra.mxu0 0.0
    %1117 = vmatpush.msra.mxu0 0.0
    %1118 = vmatpush.msra.mxu0 0.0
    %1119 = vmatpush.msra.mxu0 0.0
    %1120 = vmatpush.msra.mxu0 0.0
    %1121 = vmatpush.msra.mxu0 0.0
    %1122 = vmatpush.msra.mxu0 0.0
    %1123 = vmatpush.msra.mxu0 %v36
    %1124 = vmatpush.msra.mxu0 %v34
    %1125 = vmatpush.msra.mxu0 %v32
    %1126 = vmatpush.msra.mxu0 %v30
    %1127 = vmatmul.f32.gmra.mxu0 %v1109
    %v1128 = vpop.f32.mrf.mxu0
    %v1129 = vadd.f32 %v1086, %v1128
    %1130 = vdwg.mxu0
    %1131 = vmatpush.msra.mxu0 0.0
    %1132 = vmatpush.msra.mxu0 0.0
    %1133 = vmatpush.msra.mxu0 0.0
    %1134 = vmatpush.msra.mxu0 0.0
    %1135 = vmatpush.msra.mxu0 0.0
    %1136 = vmatpush.msra.mxu0 0.0
    %1137 = vmatpush.msra.mxu0 0.0
    %1138 = vmatpush.msra.mxu0 0.0
    %1139 = vmatpush.msra.mxu0 0.0
    %1140 = vmatpush.msra.mxu0 0.0
    %1141 = vmatpush.msra.mxu0 0.0
    %1142 = vmatpush.msra.mxu0 0.0
    %1143 = vmatpush.msra.mxu0 %v37
    %1144 = vmatpush.msra.mxu0 %v35
    %1145 = vmatpush.msra.mxu0 %v33
    %1146 = vmatpush.msra.mxu0 %v31
    %1147 = vmatmul.f32.gmra.mxu0 %v1109
    %v1148 = vpop.f32.mrf.mxu0
    %v1149 = vadd.f32 %v1106, %v1148
    %1150 = vdwg.mxu0
    %v1151 = vadd.f32 %v1129, %v72
    %v1152 = vadd.f32 %v1149, %v73
    %1153 = vmax.xlane.f32.xlu0 %v1152
    %v1154 = vpop.xlane.xlu0 %1153
    %v1155 = vsub.f32 %v1152, %v1154
    %v1156 = vmul.f32 %v1155, 1.442695
    %v1157 = vpow.pop %v1156
    %1158 = vadd.xlane.f32.xlu0 %v1157
    %v1159 = vpop.xlane.xlu0 %1158
    %v1160 = vlog2.pop %v1159
    %v1161 = vmul.f32 %v1160, 0.6931472
    %v1162 = vsub.f32 %v1155, %v1161
    %s1163 = scalar_lea.vmem [#allocation3], 80
    %1164 = vst [vmem:[%s1163] sm:$0xff] %v1162
    %s1165 = scalar_lea.vmem %s0, 88
    %v1166 = vld [vmem:[%s1165] sm:$0xff]
    %1167 = vmatpush.msra.mxu0 %v68
    %1168 = vmatpush.msra.mxu0 %v66
    %1169 = vmatpush.msra.mxu0 %v64
    %1170 = vmatpush.msra.mxu0 %v62
    %1171 = vmatpush.msra.mxu0 %v60
    %1172 = vmatpush.msra.mxu0 %v58
    %1173 = vmatpush.msra.mxu0 %v56
    %1174 = vmatpush.msra.mxu0 %v54
    %1175 = vmatpush.msra.mxu0 %v52
    %1176 = vmatpush.msra.mxu0 %v50
    %1177 = vmatpush.msra.mxu0 %v48
    %1178 = vmatpush.msra.mxu0 %v46
    %1179 = vmatpush.msra.mxu0 %v44
    %1180 = vmatpush.msra.mxu0 %v42
    %1181 = vmatpush.msra.mxu0 %v40
    %1182 = vmatpush.msra.mxu0 %v38
    %1183 = vmatmul.f32.gmra.mxu0 %v1151
    %v1184 = vpop.f32.mrf.mxu0
    %v1185 = vadd.f32 0.0, %v1184
    %1186 = vdwg.mxu0
    %1187 = vmatpush.msra.mxu0 %v69
    %1188 = vmatpush.msra.mxu0 %v67
    %1189 = vmatpush.msra.mxu0 %v65
    %1190 = vmatpush.msra.mxu0 %v63
    %1191 = vmatpush.msra.mxu0 %v61
    %1192 = vmatpush.msra.mxu0 %v59
    %1193 = vmatpush.msra.mxu0 %v57
    %1194 = vmatpush.msra.mxu0 %v55
    %1195 = vmatpush.msra.mxu0 %v53
    %1196 = vmatpush.msra.mxu0 %v51
    %1197 = vmatpush.msra.mxu0 %v49
    %1198 = vmatpush.msra.mxu0 %v47
    %1199 = vmatpush.msra.mxu0 %v45
    %1200 = vmatpush.msra.mxu0 %v43
    %1201 = vmatpush.msra.mxu0 %v41
    %1202 = vmatpush.msra.mxu0 %v39
    %1203 = vmatmul.f32.gmra.mxu0 %v1151
    %v1204 = vpop.f32.mrf.mxu0
    %v1205 = vadd.f32 0.0, %v1204
    %1206 = vdwg.mxu0
    %v1208 = vsel %vm118, %v1166, 0
    %1210 = vmatpush.msra.mxu0 0.0
    %1211 = vmatpush.msra.mxu0 0.0
    %1212 = vmatpush.msra.mxu0 0.0
    %1213 = vmatpush.msra.mxu0 0.0
    %1214 = vmatpush.msra.mxu0 0.0
    %1215 = vmatpush.msra.mxu0 0.0
    %1216 = vmatpush.msra.mxu0 0.0
    %1217 = vmatpush.msra.mxu0 0.0
    %1218 = vmatpush.msra.mxu0 0.0
    %1219 = vmatpush.msra.mxu0 0.0
    %1220 = vmatpush.msra.mxu0 0.0
    %1221 = vmatpush.msra.mxu0 0.0
    %1222 = vmatpush.msra.mxu0 %v36
    %1223 = vmatpush.msra.mxu0 %v34
    %1224 = vmatpush.msra.mxu0 %v32
    %1225 = vmatpush.msra.mxu0 %v30
    %1226 = vmatmul.f32.gmra.mxu0 %v1208
    %v1227 = vpop.f32.mrf.mxu0
    %v1228 = vadd.f32 %v1185, %v1227
    %1229 = vdwg.mxu0
    %1230 = vmatpush.msra.mxu0 0.0
    %1231 = vmatpush.msra.mxu0 0.0
    %1232 = vmatpush.msra.mxu0 0.0
    %1233 = vmatpush.msra.mxu0 0.0
    %1234 = vmatpush.msra.mxu0 0.0
    %1235 = vmatpush.msra.mxu0 0.0
    %1236 = vmatpush.msra.mxu0 0.0
    %1237 = vmatpush.msra.mxu0 0.0
    %1238 = vmatpush.msra.mxu0 0.0
    %1239 = vmatpush.msra.mxu0 0.0
    %1240 = vmatpush.msra.mxu0 0.0
    %1241 = vmatpush.msra.mxu0 0.0
    %1242 = vmatpush.msra.mxu0 %v37
    %1243 = vmatpush.msra.mxu0 %v35
    %1244 = vmatpush.msra.mxu0 %v33
    %1245 = vmatpush.msra.mxu0 %v31
    %1246 = vmatmul.f32.gmra.mxu0 %v1208
    %v1247 = vpop.f32.mrf.mxu0
    %v1248 = vadd.f32 %v1205, %v1247
    %1249 = vdwg.mxu0
    %v1250 = vadd.f32 %v1228, %v72
    %v1251 = vadd.f32 %v1248, %v73
    %1252 = vmax.xlane.f32.xlu0 %v1251
    %v1253 = vpop.xlane.xlu0 %1252
    %v1254 = vsub.f32 %v1251, %v1253
    %v1255 = vmul.f32 %v1254, 1.442695
    %v1256 = vpow.pop %v1255
    %1257 = vadd.xlane.f32.xlu0 %v1256
    %v1258 = vpop.xlane.xlu0 %1257
    %v1259 = vlog2.pop %v1258
    %v1260 = vmul.f32 %v1259, 0.6931472
    %v1261 = vsub.f32 %v1254, %v1260
    %s1262 = scalar_lea.vmem [#allocation3], 88
    %1263 = vst [vmem:[%s1262] sm:$0xff] %v1261
    %s1264 = scalar_lea.vmem %s0, 96
    %v1265 = vld [vmem:[%s1264] sm:$0xff]
    %1266 = vmatpush.msra.mxu0 %v68
    %1267 = vmatpush.msra.mxu0 %v66
    %1268 = vmatpush.msra.mxu0 %v64
    %1269 = vmatpush.msra.mxu0 %v62
    %1270 = vmatpush.msra.mxu0 %v60
    %1271 = vmatpush.msra.mxu0 %v58
    %1272 = vmatpush.msra.mxu0 %v56
    %1273 = vmatpush.msra.mxu0 %v54
    %1274 = vmatpush.msra.mxu0 %v52
    %1275 = vmatpush.msra.mxu0 %v50
    %1276 = vmatpush.msra.mxu0 %v48
    %1277 = vmatpush.msra.mxu0 %v46
    %1278 = vmatpush.msra.mxu0 %v44
    %1279 = vmatpush.msra.mxu0 %v42
    %1280 = vmatpush.msra.mxu0 %v40
    %1281 = vmatpush.msra.mxu0 %v38
    %1282 = vmatmul.f32.gmra.mxu0 %v1250
    %v1283 = vpop.f32.mrf.mxu0
    %v1284 = vadd.f32 0.0, %v1283
    %1285 = vdwg.mxu0
    %1286 = vmatpush.msra.mxu0 %v69
    %1287 = vmatpush.msra.mxu0 %v67
    %1288 = vmatpush.msra.mxu0 %v65
    %1289 = vmatpush.msra.mxu0 %v63
    %1290 = vmatpush.msra.mxu0 %v61
    %1291 = vmatpush.msra.mxu0 %v59
    %1292 = vmatpush.msra.mxu0 %v57
    %1293 = vmatpush.msra.mxu0 %v55
    %1294 = vmatpush.msra.mxu0 %v53
    %1295 = vmatpush.msra.mxu0 %v51
    %1296 = vmatpush.msra.mxu0 %v49
    %1297 = vmatpush.msra.mxu0 %v47
    %1298 = vmatpush.msra.mxu0 %v45
    %1299 = vmatpush.msra.mxu0 %v43
    %1300 = vmatpush.msra.mxu0 %v41
    %1301 = vmatpush.msra.mxu0 %v39
    %1302 = vmatmul.f32.gmra.mxu0 %v1250
    %v1303 = vpop.f32.mrf.mxu0
    %v1304 = vadd.f32 0.0, %v1303
    %1305 = vdwg.mxu0
    %v1307 = vsel %vm118, %v1265, 0
    %1309 = vmatpush.msra.mxu0 0.0
    %1310 = vmatpush.msra.mxu0 0.0
    %1311 = vmatpush.msra.mxu0 0.0
    %1312 = vmatpush.msra.mxu0 0.0
    %1313 = vmatpush.msra.mxu0 0.0
    %1314 = vmatpush.msra.mxu0 0.0
    %1315 = vmatpush.msra.mxu0 0.0
    %1316 = vmatpush.msra.mxu0 0.0
    %1317 = vmatpush.msra.mxu0 0.0
    %1318 = vmatpush.msra.mxu0 0.0
    %1319 = vmatpush.msra.mxu0 0.0
    %1320 = vmatpush.msra.mxu0 0.0
    %1321 = vmatpush.msra.mxu0 %v36
    %1322 = vmatpush.msra.mxu0 %v34
    %1323 = vmatpush.msra.mxu0 %v32
    %1324 = vmatpush.msra.mxu0 %v30
    %1325 = vmatmul.f32.gmra.mxu0 %v1307
    %v1326 = vpop.f32.mrf.mxu0
    %v1327 = vadd.f32 %v1284, %v1326
    %1328 = vdwg.mxu0
    %1329 = vmatpush.msra.mxu0 0.0
    %1330 = vmatpush.msra.mxu0 0.0
    %1331 = vmatpush.msra.mxu0 0.0
    %1332 = vmatpush.msra.mxu0 0.0
    %1333 = vmatpush.msra.mxu0 0.0
    %1334 = vmatpush.msra.mxu0 0.0
    %1335 = vmatpush.msra.mxu0 0.0
    %1336 = vmatpush.msra.mxu0 0.0
    %1337 = vmatpush.msra.mxu0 0.0
    %1338 = vmatpush.msra.mxu0 0.0
    %1339 = vmatpush.msra.mxu0 0.0
    %1340 = vmatpush.msra.mxu0 0.0
    %1341 = vmatpush.msra.mxu0 %v37
    %1342 = vmatpush.msra.mxu0 %v35
    %1343 = vmatpush.msra.mxu0 %v33
    %1344 = vmatpush.msra.mxu0 %v31
    %1345 = vmatmul.f32.gmra.mxu0 %v1307
    %v1346 = vpop.f32.mrf.mxu0
    %v1347 = vadd.f32 %v1304, %v1346
    %1348 = vdwg.mxu0
    %v1349 = vadd.f32 %v1327, %v72
    %v1350 = vadd.f32 %v1347, %v73
    %1351 = vmax.xlane.f32.xlu0 %v1350
    %v1352 = vpop.xlane.xlu0 %1351
    %v1353 = vsub.f32 %v1350, %v1352
    %v1354 = vmul.f32 %v1353, 1.442695
    %v1355 = vpow.pop %v1354
    %1356 = vadd.xlane.f32.xlu0 %v1355
    %v1357 = vpop.xlane.xlu0 %1356
    %v1358 = vlog2.pop %v1357
    %v1359 = vmul.f32 %v1358, 0.6931472
    %v1360 = vsub.f32 %v1353, %v1359
    %s1361 = scalar_lea.vmem [#allocation3], 96
    %1362 = vst [vmem:[%s1361] sm:$0xff] %v1360
    %s1363 = scalar_lea.vmem %s0, 104
    %v1364 = vld [vmem:[%s1363] sm:$0xff]
    %1365 = vmatpush.msra.mxu0 %v68
    %1366 = vmatpush.msra.mxu0 %v66
    %1367 = vmatpush.msra.mxu0 %v64
    %1368 = vmatpush.msra.mxu0 %v62
    %1369 = vmatpush.msra.mxu0 %v60
    %1370 = vmatpush.msra.mxu0 %v58
    %1371 = vmatpush.msra.mxu0 %v56
    %1372 = vmatpush.msra.mxu0 %v54
    %1373 = vmatpush.msra.mxu0 %v52
    %1374 = vmatpush.msra.mxu0 %v50
    %1375 = vmatpush.msra.mxu0 %v48
    %1376 = vmatpush.msra.mxu0 %v46
    %1377 = vmatpush.msra.mxu0 %v44
    %1378 = vmatpush.msra.mxu0 %v42
    %1379 = vmatpush.msra.mxu0 %v40
    %1380 = vmatpush.msra.mxu0 %v38
    %1381 = vmatmul.f32.gmra.mxu0 %v1349
    %v1382 = vpop.f32.mrf.mxu0
    %v1383 = vadd.f32 0.0, %v1382
    %1384 = vdwg.mxu0
    %1385 = vmatpush.msra.mxu0 %v69
    %1386 = vmatpush.msra.mxu0 %v67
    %1387 = vmatpush.msra.mxu0 %v65
    %1388 = vmatpush.msra.mxu0 %v63
    %1389 = vmatpush.msra.mxu0 %v61
    %1390 = vmatpush.msra.mxu0 %v59
    %1391 = vmatpush.msra.mxu0 %v57
    %1392 = vmatpush.msra.mxu0 %v55
    %1393 = vmatpush.msra.mxu0 %v53
    %1394 = vmatpush.msra.mxu0 %v51
    %1395 = vmatpush.msra.mxu0 %v49
    %1396 = vmatpush.msra.mxu0 %v47
    %1397 = vmatpush.msra.mxu0 %v45
    %1398 = vmatpush.msra.mxu0 %v43
    %1399 = vmatpush.msra.mxu0 %v41
    %1400 = vmatpush.msra.mxu0 %v39
    %1401 = vmatmul.f32.gmra.mxu0 %v1349
    %v1402 = vpop.f32.mrf.mxu0
    %v1403 = vadd.f32 0.0, %v1402
    %1404 = vdwg.mxu0
    %v1406 = vsel %vm118, %v1364, 0
    %1408 = vmatpush.msra.mxu0 0.0
    %1409 = vmatpush.msra.mxu0 0.0
    %1410 = vmatpush.msra.mxu0 0.0
    %1411 = vmatpush.msra.mxu0 0.0
    %1412 = vmatpush.msra.mxu0 0.0
    %1413 = vmatpush.msra.mxu0 0.0
    %1414 = vmatpush.msra.mxu0 0.0
    %1415 = vmatpush.msra.mxu0 0.0
    %1416 = vmatpush.msra.mxu0 0.0
    %1417 = vmatpush.msra.mxu0 0.0
    %1418 = vmatpush.msra.mxu0 0.0
    %1419 = vmatpush.msra.mxu0 0.0
    %1420 = vmatpush.msra.mxu0 %v36
    %1421 = vmatpush.msra.mxu0 %v34
    %1422 = vmatpush.msra.mxu0 %v32
    %1423 = vmatpush.msra.mxu0 %v30
    %1424 = vmatmul.f32.gmra.mxu0 %v1406
    %v1425 = vpop.f32.mrf.mxu0
    %v1426 = vadd.f32 %v1383, %v1425
    %1427 = vdwg.mxu0
    %1428 = vmatpush.msra.mxu0 0.0
    %1429 = vmatpush.msra.mxu0 0.0
    %1430 = vmatpush.msra.mxu0 0.0
    %1431 = vmatpush.msra.mxu0 0.0
    %1432 = vmatpush.msra.mxu0 0.0
    %1433 = vmatpush.msra.mxu0 0.0
    %1434 = vmatpush.msra.mxu0 0.0
    %1435 = vmatpush.msra.mxu0 0.0
    %1436 = vmatpush.msra.mxu0 0.0
    %1437 = vmatpush.msra.mxu0 0.0
    %1438 = vmatpush.msra.mxu0 0.0
    %1439 = vmatpush.msra.mxu0 0.0
    %1440 = vmatpush.msra.mxu0 %v37
    %1441 = vmatpush.msra.mxu0 %v35
    %1442 = vmatpush.msra.mxu0 %v33
    %1443 = vmatpush.msra.mxu0 %v31
    %1444 = vmatmul.f32.gmra.mxu0 %v1406
    %v1445 = vpop.f32.mrf.mxu0
    %v1446 = vadd.f32 %v1403, %v1445
    %1447 = vdwg.mxu0
    %v1448 = vadd.f32 %v1426, %v72
    %v1449 = vadd.f32 %v1446, %v73
    %1450 = vmax.xlane.f32.xlu0 %v1449
    %v1451 = vpop.xlane.xlu0 %1450
    %v1452 = vsub.f32 %v1449, %v1451
    %v1453 = vmul.f32 %v1452, 1.442695
    %v1454 = vpow.pop %v1453
    %1455 = vadd.xlane.f32.xlu0 %v1454
    %v1456 = vpop.xlane.xlu0 %1455
    %v1457 = vlog2.pop %v1456
    %v1458 = vmul.f32 %v1457, 0.6931472
    %v1459 = vsub.f32 %v1452, %v1458
    %s1460 = scalar_lea.vmem [#allocation3], 104
    %1461 = vst [vmem:[%s1460] sm:$0xff] %v1459
    %s1462 = scalar_lea.vmem %s0, 112
    %v1463 = vld [vmem:[%s1462] sm:$0xff]
    %1464 = vmatpush.msra.mxu0 %v68
    %1465 = vmatpush.msra.mxu0 %v66
    %1466 = vmatpush.msra.mxu0 %v64
    %1467 = vmatpush.msra.mxu0 %v62
    %1468 = vmatpush.msra.mxu0 %v60
    %1469 = vmatpush.msra.mxu0 %v58
    %1470 = vmatpush.msra.mxu0 %v56
    %1471 = vmatpush.msra.mxu0 %v54
    %1472 = vmatpush.msra.mxu0 %v52
    %1473 = vmatpush.msra.mxu0 %v50
    %1474 = vmatpush.msra.mxu0 %v48
    %1475 = vmatpush.msra.mxu0 %v46
    %1476 = vmatpush.msra.mxu0 %v44
    %1477 = vmatpush.msra.mxu0 %v42
    %1478 = vmatpush.msra.mxu0 %v40
    %1479 = vmatpush.msra.mxu0 %v38
    %1480 = vmatmul.f32.gmra.mxu0 %v1448
    %v1481 = vpop.f32.mrf.mxu0
    %v1482 = vadd.f32 0.0, %v1481
    %1483 = vdwg.mxu0
    %1484 = vmatpush.msra.mxu0 %v69
    %1485 = vmatpush.msra.mxu0 %v67
    %1486 = vmatpush.msra.mxu0 %v65
    %1487 = vmatpush.msra.mxu0 %v63
    %1488 = vmatpush.msra.mxu0 %v61
    %1489 = vmatpush.msra.mxu0 %v59
    %1490 = vmatpush.msra.mxu0 %v57
    %1491 = vmatpush.msra.mxu0 %v55
    %1492 = vmatpush.msra.mxu0 %v53
    %1493 = vmatpush.msra.mxu0 %v51
    %1494 = vmatpush.msra.mxu0 %v49
    %1495 = vmatpush.msra.mxu0 %v47
    %1496 = vmatpush.msra.mxu0 %v45
    %1497 = vmatpush.msra.mxu0 %v43
    %1498 = vmatpush.msra.mxu0 %v41
    %1499 = vmatpush.msra.mxu0 %v39
    %1500 = vmatmul.f32.gmra.mxu0 %v1448
    %v1501 = vpop.f32.mrf.mxu0
    %v1502 = vadd.f32 0.0, %v1501
    %1503 = vdwg.mxu0
    %v1505 = vsel %vm118, %v1463, 0
    %1507 = vmatpush.msra.mxu0 0.0
    %1508 = vmatpush.msra.mxu0 0.0
    %1509 = vmatpush.msra.mxu0 0.0
    %1510 = vmatpush.msra.mxu0 0.0
    %1511 = vmatpush.msra.mxu0 0.0
    %1512 = vmatpush.msra.mxu0 0.0
    %1513 = vmatpush.msra.mxu0 0.0
    %1514 = vmatpush.msra.mxu0 0.0
    %1515 = vmatpush.msra.mxu0 0.0
    %1516 = vmatpush.msra.mxu0 0.0
    %1517 = vmatpush.msra.mxu0 0.0
    %1518 = vmatpush.msra.mxu0 0.0
    %1519 = vmatpush.msra.mxu0 %v36
    %1520 = vmatpush.msra.mxu0 %v34
    %1521 = vmatpush.msra.mxu0 %v32
    %1522 = vmatpush.msra.mxu0 %v30
    %1523 = vmatmul.f32.gmra.mxu0 %v1505
    %v1524 = vpop.f32.mrf.mxu0
    %v1525 = vadd.f32 %v1482, %v1524
    %1526 = vdwg.mxu0
    %1527 = vmatpush.msra.mxu0 0.0
    %1528 = vmatpush.msra.mxu0 0.0
    %1529 = vmatpush.msra.mxu0 0.0
    %1530 = vmatpush.msra.mxu0 0.0
    %1531 = vmatpush.msra.mxu0 0.0
    %1532 = vmatpush.msra.mxu0 0.0
    %1533 = vmatpush.msra.mxu0 0.0
    %1534 = vmatpush.msra.mxu0 0.0
    %1535 = vmatpush.msra.mxu0 0.0
    %1536 = vmatpush.msra.mxu0 0.0
    %1537 = vmatpush.msra.mxu0 0.0
    %1538 = vmatpush.msra.mxu0 0.0
    %1539 = vmatpush.msra.mxu0 %v37
    %1540 = vmatpush.msra.mxu0 %v35
    %1541 = vmatpush.msra.mxu0 %v33
    %1542 = vmatpush.msra.mxu0 %v31
    %1543 = vmatmul.f32.gmra.mxu0 %v1505
    %v1544 = vpop.f32.mrf.mxu0
    %v1545 = vadd.f32 %v1502, %v1544
    %1546 = vdwg.mxu0
    %v1547 = vadd.f32 %v1525, %v72
    %v1548 = vadd.f32 %v1545, %v73
    %1549 = vmax.xlane.f32.xlu0 %v1548
    %v1550 = vpop.xlane.xlu0 %1549
    %v1551 = vsub.f32 %v1548, %v1550
    %v1552 = vmul.f32 %v1551, 1.442695
    %v1553 = vpow.pop %v1552
    %1554 = vadd.xlane.f32.xlu0 %v1553
    %v1555 = vpop.xlane.xlu0 %1554
    %v1556 = vlog2.pop %v1555
    %v1557 = vmul.f32 %v1556, 0.6931472
    %v1558 = vsub.f32 %v1551, %v1557
    %s1559 = scalar_lea.vmem [#allocation3], 112
    %1560 = vst [vmem:[%s1559] sm:$0xff] %v1558
    %s1561 = scalar_lea.vmem %s0, 120
    %v1562 = vld [vmem:[%s1561] sm:$0xff]
    %1563 = vmatpush.msra.mxu0 %v68
    %1564 = vmatpush.msra.mxu0 %v66
    %1565 = vmatpush.msra.mxu0 %v64
    %1566 = vmatpush.msra.mxu0 %v62
    %1567 = vmatpush.msra.mxu0 %v60
    %1568 = vmatpush.msra.mxu0 %v58
    %1569 = vmatpush.msra.mxu0 %v56
    %1570 = vmatpush.msra.mxu0 %v54
    %1571 = vmatpush.msra.mxu0 %v52
    %1572 = vmatpush.msra.mxu0 %v50
    %1573 = vmatpush.msra.mxu0 %v48
    %1574 = vmatpush.msra.mxu0 %v46
    %1575 = vmatpush.msra.mxu0 %v44
    %1576 = vmatpush.msra.mxu0 %v42
    %1577 = vmatpush.msra.mxu0 %v40
    %1578 = vmatpush.msra.mxu0 %v38
    %1579 = vmatmul.f32.gmra.mxu0 %v1547
    %v1580 = vpop.f32.mrf.mxu0
    %v1581 = vadd.f32 0.0, %v1580
    %1582 = vdwg.mxu0
    %1583 = vmatpush.msra.mxu0 %v69
    %1584 = vmatpush.msra.mxu0 %v67
    %1585 = vmatpush.msra.mxu0 %v65
    %1586 = vmatpush.msra.mxu0 %v63
    %1587 = vmatpush.msra.mxu0 %v61
    %1588 = vmatpush.msra.mxu0 %v59
    %1589 = vmatpush.msra.mxu0 %v57
    %1590 = vmatpush.msra.mxu0 %v55
    %1591 = vmatpush.msra.mxu0 %v53
    %1592 = vmatpush.msra.mxu0 %v51
    %1593 = vmatpush.msra.mxu0 %v49
    %1594 = vmatpush.msra.mxu0 %v47
    %1595 = vmatpush.msra.mxu0 %v45
    %1596 = vmatpush.msra.mxu0 %v43
    %1597 = vmatpush.msra.mxu0 %v41
    %1598 = vmatpush.msra.mxu0 %v39
    %1599 = vmatmul.f32.gmra.mxu0 %v1547
    %v1600 = vpop.f32.mrf.mxu0
    %v1601 = vadd.f32 0.0, %v1600
    %1602 = vdwg.mxu0
    %v1604 = vsel %vm118, %v1562, 0
    %1606 = vmatpush.msra.mxu0 0.0
    %1607 = vmatpush.msra.mxu0 0.0
    %1608 = vmatpush.msra.mxu0 0.0
    %1609 = vmatpush.msra.mxu0 0.0
    %1610 = vmatpush.msra.mxu0 0.0
    %1611 = vmatpush.msra.mxu0 0.0
    %1612 = vmatpush.msra.mxu0 0.0
    %1613 = vmatpush.msra.mxu0 0.0
    %1614 = vmatpush.msra.mxu0 0.0
    %1615 = vmatpush.msra.mxu0 0.0
    %1616 = vmatpush.msra.mxu0 0.0
    %1617 = vmatpush.msra.mxu0 0.0
    %1618 = vmatpush.msra.mxu0 %v36
    %1619 = vmatpush.msra.mxu0 %v34
    %1620 = vmatpush.msra.mxu0 %v32
    %1621 = vmatpush.msra.mxu0 %v30
    %1622 = vmatmul.f32.gmra.mxu0 %v1604
    %v1623 = vpop.f32.mrf.mxu0
    %v1624 = vadd.f32 %v1581, %v1623
    %1625 = vdwg.mxu0
    %1626 = vmatpush.msra.mxu0 0.0
    %1627 = vmatpush.msra.mxu0 0.0
    %1628 = vmatpush.msra.mxu0 0.0
    %1629 = vmatpush.msra.mxu0 0.0
    %1630 = vmatpush.msra.mxu0 0.0
    %1631 = vmatpush.msra.mxu0 0.0
    %1632 = vmatpush.msra.mxu0 0.0
    %1633 = vmatpush.msra.mxu0 0.0
    %1634 = vmatpush.msra.mxu0 0.0
    %1635 = vmatpush.msra.mxu0 0.0
    %1636 = vmatpush.msra.mxu0 0.0
    %1637 = vmatpush.msra.mxu0 0.0
    %1638 = vmatpush.msra.mxu0 %v37
    %1639 = vmatpush.msra.mxu0 %v35
    %1640 = vmatpush.msra.mxu0 %v33
    %1641 = vmatpush.msra.mxu0 %v31
    %1642 = vmatmul.f32.gmra.mxu0 %v1604
    %v1643 = vpop.f32.mrf.mxu0
    %v1644 = vadd.f32 %v1601, %v1643
    %1645 = vdwg.mxu0
    %v1646 = vadd.f32 %v1624, %v72
    %v1647 = vadd.f32 %v1644, %v73
    %1648 = vmax.xlane.f32.xlu0 %v1647
    %v1649 = vpop.xlane.xlu0 %1648
    %v1650 = vsub.f32 %v1647, %v1649
    %v1651 = vmul.f32 %v1650, 1.442695
    %v1652 = vpow.pop %v1651
    %1653 = vadd.xlane.f32.xlu0 %v1652
    %v1654 = vpop.xlane.xlu0 %1653
    %v1655 = vlog2.pop %v1654
    %v1656 = vmul.f32 %v1655, 0.6931472
    %v1657 = vsub.f32 %v1650, %v1656
    %s1658 = scalar_lea.vmem [#allocation3], 120
    %1659 = vst [vmem:[%s1658] sm:$0xff] %v1657
    %1660 = vst [vmem:[#allocation2] sm:$0xff] %v1646
    %1661 = vst [vmem:[#allocation5] sm:$0xff] %v1646
    // Predicated region
    $region26: #{rnn_sequence_forward.1} parent=1 // pred_check
      _
    $region27: #{rnn_sequence_forward.1} parent=1 // pred_check_branch
      %1663 = sbr.rel (0) target = $region29
    $region28: #{rnn_sequence_forward.1} parent=1 // pred_region
      %1665 = vsyncadd [#allocation4], 0
      %s1666 = sshll.u32 [#allocation3], 4
      %s1667 = int_to_ptr.vmem [resolvable:$true] %s1666
      %s1668 = sshll.u32 %s5, 4
      %s1669 = int_to_ptr.hbm [resolvable:$true] %s1668
      %1674 = dma.vmem_to_hbm [thread:$0]  %s1667, 2048, %s1669, [#allocation4], 128, 128, 8
    $region29: #{rnn_sequence_forward.1} parent=1 // pred_fallthru
      _
    // Predicated region
    $region30: #{rnn_sequence_forward.1} parent=1 // pred_check
      _
    $region31: #{rnn_sequence_forward.1} parent=1 // pred_check_branch
      %1676 = sbr.rel (0) target = $region33
    $region32: #{rnn_sequence_forward.1} parent=1 // pred_region
      %1678 = vsyncadd [#allocation6], 0
      %s1680 = sshll.u32 [#allocation5], 4
      %s1681 = int_to_ptr.vmem [resolvable:$true] %s1680
      %s1682 = sshll.u32 %s6, 4
      %s1683 = int_to_ptr.hbm [resolvable:$true] %s1682
      %1685 = dma.vmem_to_hbm [thread:$0]  %s1681, 128, %s1683, [#allocation6]
    $region33: #{rnn_sequence_forward.1} parent=1 // pred_fallthru
      _
    // Predicated region
    $region34: #{rnn_sequence_forward.1} parent=1 // pred_check
      _
    $region35: #{rnn_sequence_forward.1} parent=1 // pred_check_branch
      %1687 = sbr.rel (0) target = $region37
    $region36: #{rnn_sequence_forward.1} parent=1 // pred_region
      %1689 = dma.done [#allocation4], 2048
    $region37: #{rnn_sequence_forward.1} parent=1 // pred_fallthru
      _
    // Predicated region
    $region38: #{rnn_sequence_forward.1} parent=1 // pred_check
      _
    $region39: #{rnn_sequence_forward.1} parent=1 // pred_check_branch
      %1691 = sbr.rel (0) target = $region41
    $region40: #{rnn_sequence_forward.1} parent=1 // pred_region
      %1693 = dma.done [#allocation6], 128
    $region41: #{rnn_sequence_forward.1} parent=1 // pred_fallthru
      _
    %1694 = vsyncpa [#allocation4], 1
    %1695 = vsyncpa [#allocation6], 1

</llo_original>
